<compile_context>
chip_gen: v7x
topology: tpu7x:2x2x1
jax: 0.10.0
libtpu: 0.0.40
codegen_flags: <defaults>
</compile_context>

<pallas_src>
import jax
import jax.numpy as jnp
from jax.experimental import pallas as pl
from jax.experimental.pallas import tpu as pltpu


def _round_up(n, m):
    return ((n + m - 1) // m) * m


def _cdiv(a, b):
    return (a + b - 1) // b


def tied_ae_kernel(x_ref, w_ref, o_ref):
    # x_ref : (tile_b, input_dim)  bf16 batch tile
    # w_ref : (tile_l, input_dim)  bf16 latent tile of W
    # o_ref : (tile_b, input_dim)  f32 output block, resident across latent axis
    tile_l = w_ref.shape[0]
    # Sub-chunk the latent tile: keeps the (tile_b, chunk) z slice small and
    # lets the encoder matmul of chunk j+1 overlap the cast/decoder of chunk j.
    if tile_l > 512 and tile_l % 512 == 0:
        chunk = 512
    elif tile_l > 256 and tile_l % 256 == 0:
        chunk = 256
    else:
        chunk = tile_l
    n_chunks = tile_l // chunk

    x = x_ref[...]
    acc = jnp.zeros(o_ref.shape, jnp.float32)
    for j in range(n_chunks):  # static unroll (n_chunks is trace-time constant)
        w_j = w_ref[j * chunk:(j + 1) * chunk, :]
        # z_j = x @ W_j.T — NT dot (contract last dims); MXU-native, no
        # materialized transpose of the W tile.
        z_j = jax.lax.dot_general(
            x, w_j,
            dimension_numbers=(((1,), (1,)), ((), ())),
            preferred_element_type=jnp.float32,
        )
        # Tied decoder: acc += z_j @ W_j (z fed back as bf16 for the MXU).
        acc = acc + jax.lax.dot_general(
            z_j.astype(w_j.dtype), w_j,
            dimension_numbers=(((1,), (0,)), ((), ())),
            preferred_element_type=jnp.float32,
        )

    # Single store / RMW of the resident output block per grid step.
    @pl.when(pl.program_id(1) == 0)
    def _():
        o_ref[...] = acc

    @pl.when(pl.program_id(1) != 0)
    def _():
        o_ref[...] += acc


def _choose_tiles(B, latent_dim, input_dim, *,
                  vmem_budget_bytes=32 * 1024 * 1024,
                  max_tile_b=1024, max_tile_l=4096):
    """Pick balanced, alignment-friendly tiles bounded by a VMEM budget."""
    # Per-step VMEM bytes (pipeline double-buffers each input/output block):
    #   x  : 2 buf * 2 B/elem (bf16) -> 4*D per batch row
    #   out: 2 buf * 4 B/elem (f32)  -> 8*D per batch row
    #   W  : 2 buf * 2 B/elem (bf16) -> 4*D per latent row
    per_b_row = 12 * input_dim
    per_l_row = 4 * input_dim

    # --- batch axis (sublane axis of x / out) ---
    b_pad_min = _round_up(B, 8)
    cap_b = max(8, ((vmem_budget_bytes // 2) // per_b_row) // 8 * 8)
    tb_target = max(8, min(max_tile_b, cap_b))
    if b_pad_min <= tb_target:
        n_b, tile_b = 1, b_pad_min
    else:
        n_b = _cdiv(b_pad_min, tb_target)
        tile_b = _round_up(_cdiv(b_pad_min, n_b), 16)  # bf16-friendly sublanes
    # v7x megacore: give the second TensorCore a batch tile when there is
    # enough work; harmless on single-core generations.
    if n_b == 1 and b_pad_min >= 32:
        n_b = 2
        tile_b = _round_up(_cdiv(b_pad_min, 2), 16)
    b_pad = n_b * tile_b

    # --- latent axis (lane axis of z, N of encoder / K of decoder) ---
    l_align = 256 if latent_dim >= 256 else 128  # v6e/v7x MXU is 256-wide
    l_pad_min = _round_up(latent_dim, l_align)
    rem = max(vmem_budget_bytes - tile_b * per_b_row, vmem_budget_bytes // 4)
    cap_l = max(l_align, (rem // per_l_row) // l_align * l_align)
    tl_target = max(l_align, min(max_tile_l, cap_l))
    if l_pad_min <= tl_target:
        n_l, tile_l = 1, l_pad_min          # cover full latent -> grid (n_b, 1)
    else:
        n_l = _cdiv(l_pad_min, tl_target)
        tile_l = _round_up(_cdiv(l_pad_min, n_l), l_align)  # balanced tiles
    l_pad = n_l * tile_l

    return tile_b, n_b, b_pad, tile_l, n_l, l_pad


def tied_ae_forward(x, w, *, compute_dtype=jnp.bfloat16,
                    vmem_budget_bytes=32 * 1024 * 1024,
                    max_tile_b=1024, max_tile_l=4096):
    """x: (B, input_dim), w: (latent_dim, input_dim) -> (B, input_dim) reconstruction."""
    B, input_dim = x.shape
    latent_dim, input_dim_w = w.shape
    assert input_dim == input_dim_w

    tile_b, n_b, b_pad, tile_l, n_l, l_pad = _choose_tiles(
        B, latent_dim, input_dim,
        vmem_budget_bytes=vmem_budget_bytes,
        max_tile_b=max_tile_b, max_tile_l=max_tile_l)

    # Cast MXU operands to bf16 (halves HBM traffic for x/W, bf16-native MXU);
    # zero-pad ragged batch / latent (exact: zero rows contribute nothing).
    x_c = x.astype(compute_dtype)
    w_c = w.astype(compute_dtype)
    if b_pad != B:
        x_c = jnp.pad(x_c, ((0, b_pad - B), (0, 0)))
    if l_pad != latent_dim:
        w_c = jnp.pad(w_c, ((0, l_pad - latent_dim), (0, 0)))

    cost = pl.CostEstimate(
        flops=4 * b_pad * l_pad * input_dim,  # two matmuls: 2 * 2*M*N*K
        transcendentals=0,
        bytes_accessed=(x_c.size * x_c.dtype.itemsize
                        + n_b * w_c.size * w_c.dtype.itemsize
                        + b_pad * input_dim * 4),
    )

    out = pl.pallas_call(
        tied_ae_kernel,
        out_shape=jax.ShapeDtypeStruct((b_pad, input_dim), jnp.float32),
        grid_spec=pltpu.PrefetchScalarGridSpec(
            num_scalar_prefetch=0,
            grid=(n_b, n_l),
            in_specs=[
                pl.BlockSpec((tile_b, input_dim), lambda b, l: (b, 0)),  # x batch tile
                pl.BlockSpec((tile_l, input_dim), lambda b, l: (l, 0)),  # W latent tile
            ],
            out_specs=pl.BlockSpec((tile_b, input_dim), lambda b, l: (b, 0)),
        ),
        compiler_params=pltpu.CompilerParams(
            dimension_semantics=("parallel", "arbitrary"),
            # Explicit limit so larger tiles keep double-buffering on v5e
            # (16 MiB scoped default) and v7x (32 MiB default / 64 MiB physical).
            vmem_limit_bytes=48 * 1024 * 1024,
        ),
        cost_estimate=cost,
    )(x_c, w_c)

    out = out[:B]
    if out.dtype != x.dtype:
        out = out.astype(x.dtype)
    return out


def _check(x, w, x_r):
    # Reference 1: same bf16 MXU operands / f32 accumulation (tight tolerance).
    xb = x.astype(jnp.bfloat16)
    wb = w.astype(jnp.bfloat16)
    z_ref = jax.lax.dot_general(xb, wb, (((1,), (1,)), ((), ())),
                                preferred_element_type=jnp.float32)
    ref_bf16 = jax.lax.dot_general(z_ref.astype(jnp.bfloat16), wb,
                                   (((1,), (0,)), ((), ())),
                                   preferred_element_type=jnp.float32)
    assert jnp.allclose(x_r, ref_bf16, atol=2e-3, rtol=2e-3), "bf16 reference mismatch"

    # Reference 2: pure-f32 math (loose tolerance — bf16 MXU rounding).
    ref_f32 = (x @ w.T) @ w
    assert jnp.allclose(x_r, ref_f32, atol=3e-2, rtol=3e-2), "f32 reference mismatch"


if __name__ == "__main__":
    key = jax.random.PRNGKey(0)

    # Primary shape, consistent with the module: flattened input_dim=256,
    # latent_dim=2000 (padded to 2048), B=8.  Tiling collapses to grid (1, 1).
    B, input_dim, latent_dim = 8, 256, 2000
    kx, kw, key = jax.random.split(key, 3)
    x = jax.random.normal(kx, (B, input_dim), dtype=jnp.float32)
    w = jax.random.normal(kw, (latent_dim, input_dim), dtype=jnp.float32) * 0.02

    x_r = tied_ae_forward(x, w)
    x_r = jax.block_until_ready(x_r)
    assert x_r.shape == (B, input_dim)
    _check(x, w, x_r)

    # Secondary shape: exercises multi-tile grid (2 batch tiles x 2 latent
    # tiles), the latent-accumulation branch and zero-padding of W.
    B2, input_dim2, latent_dim2 = 64, 128, 300
    kx2, kw2, key = jax.random.split(key, 3)
    x2 = jax.random.normal(kx2, (B2, input_dim2), dtype=jnp.float32)
    w2 = jax.random.normal(kw2, (latent_dim2, input_dim2), dtype=jnp.float32) * 0.02

    x_r2 = tied_ae_forward(x2, w2, max_tile_l=256)
    x_r2 = jax.block_until_ready(x_r2)
    assert x_r2.shape == (B2, input_dim2)
    _check(x2, w2, x_r2)

    print("KERNEL_OK")
</pallas_src>

<mosaic_0001>
module attributes {stable_mosaic.version = 11 : i64} {
  func.func @tied_ae_kernel(%arg0: i32, %arg1: i32, %arg2: memref<8x256xbf16, #tpu.memory_space<vmem>>, %arg3: memref<2048x256xbf16, #tpu.memory_space<vmem>>, %arg4: memref<8x256xf32, #tpu.memory_space<vmem>>) attributes {dimension_semantics = [#tpu.dimension_semantics<parallel>, #tpu.dimension_semantics<arbitrary>], iteration_bounds = array<i64: 1, 1>, scalar_prefetch = 0 : i64, scratch_operands = 0 : i64, tpu.core_type = #tpu.core_type<tc>, window_params = [{transform_indices = @transform_0, window_bounds = array<i64: 8, 256>}, {transform_indices = @transform_1, window_bounds = array<i64: 2048, 256>}, {transform_indices = @transform_2, window_bounds = array<i64: 8, 256>}]} {
    %c0 = arith.constant 0 : index
    %c0_0 = arith.constant 0 : index
    %0 = vector.load %arg2[%c0, %c0_0] : memref<8x256xbf16, #tpu.memory_space<vmem>>, vector<8x256xbf16>
    %cst = arith.constant 0.000000e+00 : f32
    %1 = vector.broadcast %cst : f32 to vector<8x256xf32>
    %c0_1 = arith.constant 0 : index
    %c0_2 = arith.constant 0 : index
    %2 = vector.load %arg3[%c0_1, %c0_2] : memref<2048x256xbf16, #tpu.memory_space<vmem>>, vector<512x256xbf16>
    %cst_3 = arith.constant dense<0.000000e+00> : vector<8x512xf32>
    %3 = tpu.matmul %0, %2, %cst_3 {dimension_numbers = #tpu.dot_dimension_numbers<[1], [1], [0], [0], [0, 0, 1, 0], [], []>} : vector<8x256xbf16>, vector<512x256xbf16>, vector<8x512xf32> -> vector<8x512xf32>
    %4 = arith.truncf %3 : vector<8x512xf32> to vector<8x512xbf16>
    %cst_4 = arith.constant dense<0.000000e+00> : vector<8x256xf32>
    %5 = tpu.matmul %4, %2, %cst_4 {dimension_numbers = #tpu.dot_dimension_numbers<[1], [0], [0], [1], [0, 0, 1, 1], [], []>} : vector<8x512xbf16>, vector<512x256xbf16>, vector<8x256xf32> -> vector<8x256xf32>
    %6 = arith.addf %1, %5 : vector<8x256xf32>
    %c512 = arith.constant 512 : index
    %c0_5 = arith.constant 0 : index
    %7 = vector.load %arg3[%c512, %c0_5] : memref<2048x256xbf16, #tpu.memory_space<vmem>>, vector<512x256xbf16>
    %cst_6 = arith.constant dense<0.000000e+00> : vector<8x512xf32>
    %8 = tpu.matmul %0, %7, %cst_6 {dimension_numbers = #tpu.dot_dimension_numbers<[1], [1], [0], [0], [0, 0, 1, 0], [], []>} : vector<8x256xbf16>, vector<512x256xbf16>, vector<8x512xf32> -> vector<8x512xf32>
    %9 = arith.truncf %8 : vector<8x512xf32> to vector<8x512xbf16>
    %cst_7 = arith.constant dense<0.000000e+00> : vector<8x256xf32>
    %10 = tpu.matmul %9, %7, %cst_7 {dimension_numbers = #tpu.dot_dimension_numbers<[1], [0], [0], [1], [0, 0, 1, 1], [], []>} : vector<8x512xbf16>, vector<512x256xbf16>, vector<8x256xf32> -> vector<8x256xf32>
    %11 = arith.addf %6, %10 : vector<8x256xf32>
    %c1024 = arith.constant 1024 : index
    %c0_8 = arith.constant 0 : index
    %12 = vector.load %arg3[%c1024, %c0_8] : memref<2048x256xbf16, #tpu.memory_space<vmem>>, vector<512x256xbf16>
    %cst_9 = arith.constant dense<0.000000e+00> : vector<8x512xf32>
    %13 = tpu.matmul %0, %12, %cst_9 {dimension_numbers = #tpu.dot_dimension_numbers<[1], [1], [0], [0], [0, 0, 1, 0], [], []>} : vector<8x256xbf16>, vector<512x256xbf16>, vector<8x512xf32> -> vector<8x512xf32>
    %14 = arith.truncf %13 : vector<8x512xf32> to vector<8x512xbf16>
    %cst_10 = arith.constant dense<0.000000e+00> : vector<8x256xf32>
    %15 = tpu.matmul %14, %12, %cst_10 {dimension_numbers = #tpu.dot_dimension_numbers<[1], [0], [0], [1], [0, 0, 1, 1], [], []>} : vector<8x512xbf16>, vector<512x256xbf16>, vector<8x256xf32> -> vector<8x256xf32>
    %16 = arith.addf %11, %15 : vector<8x256xf32>
    %c1536 = arith.constant 1536 : index
    %c0_11 = arith.constant 0 : index
    %17 = vector.load %arg3[%c1536, %c0_11] : memref<2048x256xbf16, #tpu.memory_space<vmem>>, vector<512x256xbf16>
    %cst_12 = arith.constant dense<0.000000e+00> : vector<8x512xf32>
    %18 = tpu.matmul %0, %17, %cst_12 {dimension_numbers = #tpu.dot_dimension_numbers<[1], [1], [0], [0], [0, 0, 1, 0], [], []>} : vector<8x256xbf16>, vector<512x256xbf16>, vector<8x512xf32> -> vector<8x512xf32>
    %19 = arith.truncf %18 : vector<8x512xf32> to vector<8x512xbf16>
    %cst_13 = arith.constant dense<0.000000e+00> : vector<8x256xf32>
    %20 = tpu.matmul %19, %17, %cst_13 {dimension_numbers = #tpu.dot_dimension_numbers<[1], [0], [0], [1], [0, 0, 1, 1], [], []>} : vector<8x512xbf16>, vector<512x256xbf16>, vector<8x256xf32> -> vector<8x256xf32>
    %21 = arith.addf %16, %20 : vector<8x256xf32>
    %c0_i32 = arith.constant 0 : i32
    %22 = arith.cmpi eq, %arg1, %c0_i32 : i32
    %23 = arith.extui %22 : i1 to i32
    %c0_i32_14 = arith.constant 0 : i32
    %24 = arith.cmpi ne, %23, %c0_i32_14 : i32
    scf.if %24 {
      %c0_17 = arith.constant 0 : index
      %c0_18 = arith.constant 0 : index
      %28 = vector.load %arg4[%c0_17, %c0_18] : memref<8x256xf32, #tpu.memory_space<vmem>>, vector<8x256xf32>
      tpu.vector_store %arg4[%c0_17, %c0_18], %21 {strides = array<i32>} : memref<8x256xf32, #tpu.memory_space<vmem>>, vector<8x256xf32>,
    } else {
    }
    %c0_i32_15 = arith.constant 0 : i32
    %25 = arith.cmpi ne, %arg1, %c0_i32_15 : i32
    %26 = arith.extui %25 : i1 to i32
    %c0_i32_16 = arith.constant 0 : i32
    %27 = arith.cmpi ne, %26, %c0_i32_16 : i32
    scf.if %27 {
      %c0_17 = arith.constant 0 : index
      %c0_18 = arith.constant 0 : index
      %28 = vector.load %arg4[%c0_17, %c0_18] : memref<8x256xf32, #tpu.memory_space<vmem>>, vector<8x256xf32>
      %29 = arith.addf %28, %21 : vector<8x256xf32>
      %c0_19 = arith.constant 0 : index
      %c0_20 = arith.constant 0 : index
      %30 = vector.load %arg4[%c0_19, %c0_20] : memref<8x256xf32, #tpu.memory_space<vmem>>, vector<8x256xf32>
      tpu.vector_store %arg4[%c0_19, %c0_20], %29 {strides = array<i32>} : memref<8x256xf32, #tpu.memory_space<vmem>>, vector<8x256xf32>,
    } else {
    }
    return
  }
  func.func @transform_0(%arg0: i32, %arg1: i32) -> (i32, i32) {
    %c0_i32 = arith.constant 0 : i32
    %c0_i32_0 = arith.constant 0 : i32
    return %arg0, %c0_i32 : i32, i32
  }
  func.func @transform_1(%arg0: i32, %arg1: i32) -> (i32, i32) {
    %c0_i32 = arith.constant 0 : i32
    %c0_i32_0 = arith.constant 0 : i32
    return %arg1, %c0_i32 : i32, i32
  }
  func.func @transform_2(%arg0: i32, %arg1: i32) -> (i32, i32) {
    %c0_i32 = arith.constant 0 : i32
    %c0_i32_0 = arith.constant 0 : i32
    return %arg0, %c0_i32 : i32, i32
  }
}

</mosaic_0001>

<llo_original>
// kernel: tpu_custom_call.1
$region0: #{tpu_custom_call.1}
  #allocation0 [shape = 'u32[]', space=smem, size = 0x4, offset = 0x4, fixed_abs, tag = 'smem constant byte address 0x4 - core index']
  #allocation1 [shape = 'u32[144,128]{1,0:T(1,128)}', space=vmem, size = 0x12000, scoped, tag = 'internal scratch']
  %s0 = inlined_call_operand.hbm [shape: bf16[8,256], index: 0, kind: input, shape index: {}]
  %s1 = inlined_call_operand.hbm [shape: bf16[2048,256], index: 1, kind: input, shape index: {}]
  %s2 = inlined_call_operand.hbm [shape: f32[8,256], index: 2, kind: output, shape index: {}]
  %s3 = sld [smem:[#allocation0]]
  $region34: #{tpu_custom_call.1} parent=0
    _
  %s5 = ssub.s32 1, %s3
  %s6 = scalar_select 0, %s5, %s3
  $region1: #{tpu_custom_call.1} parent=0
    #allocation2 [shape = 'u8[4096]{0}', space=vmem, size = 0x1000, scoped, tag = 'input window, operand 0, single buffered']
    #allocation3 [shape = 's32[1]{0}', space=sflag, size = 0x4, scoped, tag = 'scoped memory for tpu_custom_call.1']
    #allocation4 [shape = 's32[1]{0}', space=sflag, size = 0x4, scoped, tag = 'scoped memory for tpu_custom_call.1']
    #allocation5 [shape = 'u8[1048576]{0}', space=vmem, size = 0x100000, scoped, tag = 'input window, operand 1, single buffered']
    #allocation6 [shape = 's32[1]{0}', space=sflag, size = 0x4, scoped, tag = 'scoped memory for tpu_custom_call.1']
    #allocation7 [shape = 'u8[8192]{0}', space=vmem, size = 0x2000, scoped, tag = 'output window, operand 0, single buffered']
    %7 = vsyncpa [#allocation3], 0
    %8 = vsyncpa [#allocation6], 0
    %9 = vsyncpa [#allocation4], 0
    // Predicated region
    $region2: #{tpu_custom_call.1} parent=1 // pred_check
      _
    $region3: #{tpu_custom_call.1} parent=1 // pred_check_branch
      %11 = sbr.rel (0) target = $region5
    $region4: #{tpu_custom_call.1} parent=1 // pred_region
      %s13 = ssub.s32 128, 128
      %14 = vsyncadd [#allocation3], %s13
      %s16 = sshll.u32 [#allocation2], 4
      %s17 = int_to_ptr.vmem [resolvable:$true] %s16
      %19 = dma.hbm_to_vmem [thread:$0]  %s0, 128, %s17, [#allocation3]
    $region5: #{tpu_custom_call.1} parent=1 // pred_fallthru
      _
    // Predicated region
    $region6: #{tpu_custom_call.1} parent=1 // pred_check
      _
    $region7: #{tpu_custom_call.1} parent=1 // pred_check_branch
      %21 = sbr.rel (0) target = $region9
    $region8: #{tpu_custom_call.1} parent=1 // pred_region
      %s23 = ssub.s32 32768, 32768
      %24 = vsyncadd [#allocation6], %s23
      %s25 = sshll.u32 [#allocation5], 4
      %s26 = int_to_ptr.vmem [resolvable:$true] %s25
      %31 = dma.hbm_to_vmem [thread:$0]  %s1, 32768, %s26, [#allocation6], 128, 128, 8
    $region9: #{tpu_custom_call.1} parent=1 // pred_fallthru
      _
    // Predicated region
    $region10: #{tpu_custom_call.1} parent=1 // pred_check
      _
    $region11: #{tpu_custom_call.1} parent=1 // pred_check_branch
      %33 = sbr.rel (0) target = $region13
    $region12: #{tpu_custom_call.1} parent=1 // pred_region
      %34 = dma.done [#allocation3], 128
    $region13: #{tpu_custom_call.1} parent=1 // pred_fallthru
      _
    // Predicated region
    $region14: #{tpu_custom_call.1} parent=1 // pred_check
      _
    $region15: #{tpu_custom_call.1} parent=1 // pred_check_branch
      %36 = sbr.rel (0) target = $region17
    $region16: #{tpu_custom_call.1} parent=1 // pred_region
      %37 = dma.done [#allocation6], 32768
    $region17: #{tpu_custom_call.1} parent=1 // pred_fallthru
      _
    %v38 = vld [vmem:[#allocation2] sm:$0xff]
    %v39 = vld [vmem:[#allocation5] sm:$0xff]
    %v40 = vld [vmem:[#allocation5 + $0x8] sm:$0xff]
    %v41 = vld [vmem:[#allocation5 + $0x10] sm:$0xff]
    %v42 = vld [vmem:[#allocation5 + $0x18] sm:$0xff]
    %v43 = vld [vmem:[#allocation5 + $0x20] sm:$0xff]
    %v44 = vld [vmem:[#allocation5 + $0x28] sm:$0xff]
    %v45 = vld [vmem:[#allocation5 + $0x30] sm:$0xff]
    %v46 = vld [vmem:[#allocation5 + $0x38] sm:$0xff]
    %v47 = vld [vmem:[#allocation5 + $0x40] sm:$0xff]
    %v48 = vld [vmem:[#allocation5 + $0x48] sm:$0xff]
    %v49 = vld [vmem:[#allocation5 + $0x50] sm:$0xff]
    %v50 = vld [vmem:[#allocation5 + $0x58] sm:$0xff]
    %v51 = vld [vmem:[#allocation5 + $0x60] sm:$0xff]
    %v52 = vld [vmem:[#allocation5 + $0x68] sm:$0xff]
    %v53 = vld [vmem:[#allocation5 + $0x70] sm:$0xff]
    %v54 = vld [vmem:[#allocation5 + $0x78] sm:$0xff]
    %v55 = vld [vmem:[#allocation5 + $0x80] sm:$0xff]
    %v56 = vld [vmem:[#allocation5 + $0x88] sm:$0xff]
    %v57 = vld [vmem:[#allocation5 + $0x90] sm:$0xff]
    %v58 = vld [vmem:[#allocation5 + $0x98] sm:$0xff]
    %v59 = vld [vmem:[#allocation5 + $0xa0] sm:$0xff]
    %v60 = vld [vmem:[#allocation5 + $0xa8] sm:$0xff]
    %v61 = vld [vmem:[#allocation5 + $0xb0] sm:$0xff]
    %v62 = vld [vmem:[#allocation5 + $0xb8] sm:$0xff]
    %v63 = vld [vmem:[#allocation5 + $0xc0] sm:$0xff]
    %v64 = vld [vmem:[#allocation5 + $0xc8] sm:$0xff]
    %v65 = vld [vmem:[#allocation5 + $0xd0] sm:$0xff]
    %v66 = vld [vmem:[#allocation5 + $0xd8] sm:$0xff]
    %v67 = vld [vmem:[#allocation5 + $0xe0] sm:$0xff]
    %v68 = vld [vmem:[#allocation5 + $0xe8] sm:$0xff]
    %v69 = vld [vmem:[#allocation5 + $0xf0] sm:$0xff]
    %v70 = vld [vmem:[#allocation5 + $0xf8] sm:$0xff]
    %v71 = vld [vmem:[#allocation5 + $0x100] sm:$0xff]
    %v72 = vld [vmem:[#allocation5 + $0x108] sm:$0xff]
    %v73 = vld [vmem:[#allocation5 + $0x110] sm:$0xff]
    %v74 = vld [vmem:[#allocation5 + $0x118] sm:$0xff]
    %v75 = vld [vmem:[#allocation5 + $0x120] sm:$0xff]
    %v76 = vld [vmem:[#allocation5 + $0x128] sm:$0xff]
    %v77 = vld [vmem:[#allocation5 + $0x130] sm:$0xff]
    %v78 = vld [vmem:[#allocation5 + $0x138] sm:$0xff]
    %v79 = vld [vmem:[#allocation5 + $0x140] sm:$0xff]
    %v80 = vld [vmem:[#allocation5 + $0x148] sm:$0xff]
    %v81 = vld [vmem:[#allocation5 + $0x150] sm:$0xff]
    %v82 = vld [vmem:[#allocation5 + $0x158] sm:$0xff]
    %v83 = vld [vmem:[#allocation5 + $0x160] sm:$0xff]
    %v84 = vld [vmem:[#allocation5 + $0x168] sm:$0xff]
    %v85 = vld [vmem:[#allocation5 + $0x170] sm:$0xff]
    %v86 = vld [vmem:[#allocation5 + $0x178] sm:$0xff]
    %v87 = vld [vmem:[#allocation5 + $0x180] sm:$0xff]
    %v88 = vld [vmem:[#allocation5 + $0x188] sm:$0xff]
    %v89 = vld [vmem:[#allocation5 + $0x190] sm:$0xff]
    %v90 = vld [vmem:[#allocation5 + $0x198] sm:$0xff]
    %v91 = vld [vmem:[#allocation5 + $0x1a0] sm:$0xff]
    %v92 = vld [vmem:[#allocation5 + $0x1a8] sm:$0xff]
    %v93 = vld [vmem:[#allocation5 + $0x1b0] sm:$0xff]
    %v94 = vld [vmem:[#allocation5 + $0x1b8] sm:$0xff]
    %v95 = vld [vmem:[#allocation5 + $0x1c0] sm:$0xff]
    %v96 = vld [vmem:[#allocation5 + $0x1c8] sm:$0xff]
    %v97 = vld [vmem:[#allocation5 + $0x1d0] sm:$0xff]
    %v98 = vld [vmem:[#allocation5 + $0x1d8] sm:$0xff]
    %v99 = vld [vmem:[#allocation5 + $0x1e0] sm:$0xff]
    %v100 = vld [vmem:[#allocation5 + $0x1e8] sm:$0xff]
    %v101 = vld [vmem:[#allocation5 + $0x1f0] sm:$0xff]
    %v102 = vld [vmem:[#allocation5 + $0x1f8] sm:$0xff]
    %v104 = vunpack.c.l.b16 %v38
    %v105 = vunpack.c.h.b16 %v38
    %v106 = vpack.c.b16 %v104, %v104
    %v107 = vpack.c.b16 %v105, %v105
    %v174 = vunpack.c.l.b16 %v39
    %v175 = vunpack.c.h.b16 %v39
    %v176 = vunpack.c.l.b16 %v40
    %v177 = vunpack.c.h.b16 %v40
    %v178 = vunpack.c.l.b16 %v41
    %v179 = vunpack.c.h.b16 %v41
    %v180 = vunpack.c.l.b16 %v42
    %v181 = vunpack.c.h.b16 %v42
    %v182 = vunpack.c.l.b16 %v43
    %v183 = vunpack.c.h.b16 %v43
    %v184 = vunpack.c.l.b16 %v44
    %v185 = vunpack.c.h.b16 %v44
    %v186 = vunpack.c.l.b16 %v45
    %v187 = vunpack.c.h.b16 %v45
    %v188 = vunpack.c.l.b16 %v46
    %v189 = vunpack.c.h.b16 %v46
    %v190 = vunpack.c.l.b16 %v47
    %v191 = vunpack.c.h.b16 %v47
    %v192 = vunpack.c.l.b16 %v48
    %v193 = vunpack.c.h.b16 %v48
    %v194 = vunpack.c.l.b16 %v49
    %v195 = vunpack.c.h.b16 %v49
    %v196 = vunpack.c.l.b16 %v50
    %v197 = vunpack.c.h.b16 %v50
    %v198 = vunpack.c.l.b16 %v51
    %v199 = vunpack.c.h.b16 %v51
    %v200 = vunpack.c.l.b16 %v52
    %v201 = vunpack.c.h.b16 %v52
    %v202 = vunpack.c.l.b16 %v53
    %v203 = vunpack.c.h.b16 %v53
    %v204 = vunpack.c.l.b16 %v54
    %v205 = vunpack.c.h.b16 %v54
    %v206 = vunpack.c.l.b16 %v55
    %v207 = vunpack.c.h.b16 %v55
    %v208 = vunpack.c.l.b16 %v56
    %v209 = vunpack.c.h.b16 %v56
    %v210 = vunpack.c.l.b16 %v57
    %v211 = vunpack.c.h.b16 %v57
    %v212 = vunpack.c.l.b16 %v58
    %v213 = vunpack.c.h.b16 %v58
    %v214 = vunpack.c.l.b16 %v59
    %v215 = vunpack.c.h.b16 %v59
    %v216 = vunpack.c.l.b16 %v60
    %v217 = vunpack.c.h.b16 %v60
    %v218 = vunpack.c.l.b16 %v61
    %v219 = vunpack.c.h.b16 %v61
    %v220 = vunpack.c.l.b16 %v62
    %v221 = vunpack.c.h.b16 %v62
    %v222 = vunpack.c.l.b16 %v63
    %v223 = vunpack.c.h.b16 %v63
    %v224 = vunpack.c.l.b16 %v64
    %v225 = vunpack.c.h.b16 %v64
    %v226 = vunpack.c.l.b16 %v65
    %v227 = vunpack.c.h.b16 %v65
    %v228 = vunpack.c.l.b16 %v66
    %v229 = vunpack.c.h.b16 %v66
    %v230 = vunpack.c.l.b16 %v67
    %v231 = vunpack.c.h.b16 %v67
    %v232 = vunpack.c.l.b16 %v68
    %v233 = vunpack.c.h.b16 %v68
    %v234 = vunpack.c.l.b16 %v69
    %v235 = vunpack.c.h.b16 %v69
    %v236 = vunpack.c.l.b16 %v70
    %v237 = vunpack.c.h.b16 %v70
    %v238 = vunpack.c.l.b16 %v71
    %v239 = vunpack.c.h.b16 %v71
    %v240 = vunpack.c.l.b16 %v72
    %v241 = vunpack.c.h.b16 %v72
    %v242 = vunpack.c.l.b16 %v73
    %v243 = vunpack.c.h.b16 %v73
    %v244 = vunpack.c.l.b16 %v74
    %v245 = vunpack.c.h.b16 %v74
    %v246 = vunpack.c.l.b16 %v75
    %v247 = vunpack.c.h.b16 %v75
    %v248 = vunpack.c.l.b16 %v76
    %v249 = vunpack.c.h.b16 %v76
    %v250 = vunpack.c.l.b16 %v77
    %v251 = vunpack.c.h.b16 %v77
    %v252 = vunpack.c.l.b16 %v78
    %v253 = vunpack.c.h.b16 %v78
    %v254 = vunpack.c.l.b16 %v79
    %v255 = vunpack.c.h.b16 %v79
    %v256 = vunpack.c.l.b16 %v80
    %v257 = vunpack.c.h.b16 %v80
    %v258 = vunpack.c.l.b16 %v81
    %v259 = vunpack.c.h.b16 %v81
    %v260 = vunpack.c.l.b16 %v82
    %v261 = vunpack.c.h.b16 %v82
    %v262 = vunpack.c.l.b16 %v83
    %v263 = vunpack.c.h.b16 %v83
    %v264 = vunpack.c.l.b16 %v84
    %v265 = vunpack.c.h.b16 %v84
    %v266 = vunpack.c.l.b16 %v85
    %v267 = vunpack.c.h.b16 %v85
    %v268 = vunpack.c.l.b16 %v86
    %v269 = vunpack.c.h.b16 %v86
    %v270 = vunpack.c.l.b16 %v87
    %v271 = vunpack.c.h.b16 %v87
    %v272 = vunpack.c.l.b16 %v88
    %v273 = vunpack.c.h.b16 %v88
    %v274 = vunpack.c.l.b16 %v89
    %v275 = vunpack.c.h.b16 %v89
    %v276 = vunpack.c.l.b16 %v90
    %v277 = vunpack.c.h.b16 %v90
    %v278 = vunpack.c.l.b16 %v91
    %v279 = vunpack.c.h.b16 %v91
    %v280 = vunpack.c.l.b16 %v92
    %v281 = vunpack.c.h.b16 %v92
    %v282 = vunpack.c.l.b16 %v93
    %v283 = vunpack.c.h.b16 %v93
    %v284 = vunpack.c.l.b16 %v94
    %v285 = vunpack.c.h.b16 %v94
    %v286 = vunpack.c.l.b16 %v95
    %v287 = vunpack.c.h.b16 %v95
    %v288 = vunpack.c.l.b16 %v96
    %v289 = vunpack.c.h.b16 %v96
    %v290 = vunpack.c.l.b16 %v97
    %v291 = vunpack.c.h.b16 %v97
    %v292 = vunpack.c.l.b16 %v98
    %v293 = vunpack.c.h.b16 %v98
    %v294 = vunpack.c.l.b16 %v99
    %v295 = vunpack.c.h.b16 %v99
    %v296 = vunpack.c.l.b16 %v100
    %v297 = vunpack.c.h.b16 %v100
    %v298 = vunpack.c.l.b16 %v101
    %v299 = vunpack.c.h.b16 %v101
    %v300 = vunpack.c.l.b16 %v102
    %v301 = vunpack.c.h.b16 %v102
    %v302 = vpack.c.b16 %v176, %v174
    %v303 = vpack.c.b16 %v177, %v175
    %v304 = vpack.c.b16 %v180, %v178
    %v305 = vpack.c.b16 %v181, %v179
    %v306 = vpack.c.b16 %v184, %v182
    %v307 = vpack.c.b16 %v185, %v183
    %v308 = vpack.c.b16 %v188, %v186
    %v309 = vpack.c.b16 %v189, %v187
    %v310 = vpack.c.b16 %v192, %v190
    %v311 = vpack.c.b16 %v193, %v191
    %v312 = vpack.c.b16 %v196, %v194
    %v313 = vpack.c.b16 %v197, %v195
    %v314 = vpack.c.b16 %v200, %v198
    %v315 = vpack.c.b16 %v201, %v199
    %v316 = vpack.c.b16 %v204, %v202
    %v317 = vpack.c.b16 %v205, %v203
    %v318 = vpack.c.b16 %v208, %v206
    %v319 = vpack.c.b16 %v209, %v207
    %v320 = vpack.c.b16 %v212, %v210
    %v321 = vpack.c.b16 %v213, %v211
    %v322 = vpack.c.b16 %v216, %v214
    %v323 = vpack.c.b16 %v217, %v215
    %v324 = vpack.c.b16 %v220, %v218
    %v325 = vpack.c.b16 %v221, %v219
    %v326 = vpack.c.b16 %v224, %v222
    %v327 = vpack.c.b16 %v225, %v223
    %v328 = vpack.c.b16 %v228, %v226
    %v329 = vpack.c.b16 %v229, %v227
    %v330 = vpack.c.b16 %v232, %v230
    %v331 = vpack.c.b16 %v233, %v231
    %v332 = vpack.c.b16 %v236, %v234
    %v333 = vpack.c.b16 %v237, %v235
    %v334 = vpack.c.b16 %v240, %v238
    %v335 = vpack.c.b16 %v241, %v239
    %v336 = vpack.c.b16 %v244, %v242
    %v337 = vpack.c.b16 %v245, %v243
    %v338 = vpack.c.b16 %v248, %v246
    %v339 = vpack.c.b16 %v249, %v247
    %v340 = vpack.c.b16 %v252, %v250
    %v341 = vpack.c.b16 %v253, %v251
    %v342 = vpack.c.b16 %v256, %v254
    %v343 = vpack.c.b16 %v257, %v255
    %v344 = vpack.c.b16 %v260, %v258
    %v345 = vpack.c.b16 %v261, %v259
    %v346 = vpack.c.b16 %v264, %v262
    %v347 = vpack.c.b16 %v265, %v263
    %v348 = vpack.c.b16 %v268, %v266
    %v349 = vpack.c.b16 %v269, %v267
    %v350 = vpack.c.b16 %v272, %v270
    %v351 = vpack.c.b16 %v273, %v271
    %v352 = vpack.c.b16 %v276, %v274
    %v353 = vpack.c.b16 %v277, %v275
    %v354 = vpack.c.b16 %v280, %v278
    %v355 = vpack.c.b16 %v281, %v279
    %v356 = vpack.c.b16 %v284, %v282
    %v357 = vpack.c.b16 %v285, %v283
    %v358 = vpack.c.b16 %v288, %v286
    %v359 = vpack.c.b16 %v289, %v287
    %v360 = vpack.c.b16 %v292, %v290
    %v361 = vpack.c.b16 %v293, %v291
    %v362 = vpack.c.b16 %v296, %v294
    %v363 = vpack.c.b16 %v297, %v295
    %v364 = vpack.c.b16 %v300, %v298
    %v365 = vpack.c.b16 %v301, %v299
    %430 = vmatprep.subr.bf16.mxu0 %v303
    %431 = vmatpush1.bf16.xpose.msra.mxu0 %v302
    %432 = vmatprep.subr.bf16.mxu0 %v305
    %433 = vmatpush1.bf16.xpose.msra.mxu0 %v304
    %434 = vmatprep.subr.bf16.mxu0 %v307
    %435 = vmatpush1.bf16.xpose.msra.mxu0 %v306
    %436 = vmatprep.subr.bf16.mxu0 %v309
    %437 = vmatpush1.bf16.xpose.msra.mxu0 %v308
    %438 = vmatprep.subr.bf16.mxu0 %v311
    %439 = vmatpush1.bf16.xpose.msra.mxu0 %v310
    %440 = vmatprep.subr.bf16.mxu0 %v313
    %441 = vmatpush1.bf16.xpose.msra.mxu0 %v312
    %442 = vmatprep.subr.bf16.mxu0 %v315
    %443 = vmatpush1.bf16.xpose.msra.mxu0 %v314
    %444 = vmatprep.subr.bf16.mxu0 %v317
    %445 = vmatpush1.bf16.xpose.msra.mxu0 %v316
    %446 = vmatprep.subr.bf16.mxu0 %v319
    %447 = vmatpush1.bf16.xpose.msra.mxu0 %v318
    %448 = vmatprep.subr.bf16.mxu0 %v321
    %449 = vmatpush1.bf16.xpose.msra.mxu0 %v320
    %450 = vmatprep.subr.bf16.mxu0 %v323
    %451 = vmatpush1.bf16.xpose.msra.mxu0 %v322
    %452 = vmatprep.subr.bf16.mxu0 %v325
    %453 = vmatpush1.bf16.xpose.msra.mxu0 %v324
    %454 = vmatprep.subr.bf16.mxu0 %v327
    %455 = vmatpush1.bf16.xpose.msra.mxu0 %v326
    %456 = vmatprep.subr.bf16.mxu0 %v329
    %457 = vmatpush1.bf16.xpose.msra.mxu0 %v328
    %458 = vmatprep.subr.bf16.mxu0 %v331
    %459 = vmatpush1.bf16.xpose.msra.mxu0 %v330
    %460 = vmatprep.subr.bf16.mxu0 %v333
    %461 = vmatpush1.bf16.xpose.msra.mxu0 %v332
    %462 = vmatprep.mubr.bf16.mxu0 %v107
    %463 = vmatmul.mubr.bf16.gmra.mrb[0].mxu0 %v106
    %v464 = vpop.f32.mrb[0].mxu0
    %v465 = vadd.f32 0.0, %v464
    %v466 = vpop.f32.mrb[0].mxu0
    %v467 = vadd.f32 0.0, %v466
    %v468 = vpop.f32.mrb[0].mxu0
    %v469 = vpop.f32.mrb[0].mxu0
    %470 = vdwg.mxu0
    %471 = vmatprep.subr.bf16.mxu0 %v335
    %472 = vmatpush1.bf16.xpose.msra.mxu0 %v334
    %473 = vmatprep.subr.bf16.mxu0 %v337
    %474 = vmatpush1.bf16.xpose.msra.mxu0 %v336
    %475 = vmatprep.subr.bf16.mxu0 %v339
    %476 = vmatpush1.bf16.xpose.msra.mxu0 %v338
    %477 = vmatprep.subr.bf16.mxu0 %v341
    %478 = vmatpush1.bf16.xpose.msra.mxu0 %v340
    %479 = vmatprep.subr.bf16.mxu0 %v343
    %480 = vmatpush1.bf16.xpose.msra.mxu0 %v342
    %481 = vmatprep.subr.bf16.mxu0 %v345
    %482 = vmatpush1.bf16.xpose.msra.mxu0 %v344
    %483 = vmatprep.subr.bf16.mxu0 %v347
    %484 = vmatpush1.bf16.xpose.msra.mxu0 %v346
    %485 = vmatprep.subr.bf16.mxu0 %v349
    %486 = vmatpush1.bf16.xpose.msra.mxu0 %v348
    %487 = vmatprep.subr.bf16.mxu0 %v351
    %488 = vmatpush1.bf16.xpose.msra.mxu0 %v350
    %489 = vmatprep.subr.bf16.mxu0 %v353
    %490 = vmatpush1.bf16.xpose.msra.mxu0 %v352
    %491 = vmatprep.subr.bf16.mxu0 %v355
    %492 = vmatpush1.bf16.xpose.msra.mxu0 %v354
    %493 = vmatprep.subr.bf16.mxu0 %v357
    %494 = vmatpush1.bf16.xpose.msra.mxu0 %v356
    %495 = vmatprep.subr.bf16.mxu0 %v359
    %496 = vmatpush1.bf16.xpose.msra.mxu0 %v358
    %497 = vmatprep.subr.bf16.mxu0 %v361
    %498 = vmatpush1.bf16.xpose.msra.mxu0 %v360
    %499 = vmatprep.subr.bf16.mxu0 %v363
    %500 = vmatpush1.bf16.xpose.msra.mxu0 %v362
    %501 = vmatprep.subr.bf16.mxu0 %v365
    %502 = vmatpush1.bf16.xpose.msra.mxu0 %v364
    %503 = vmatprep.mubr.bf16.mxu0 %v107
    %504 = vmatmul.mubr.bf16.gmra.mrb[0].mxu0 %v106
    %v505 = vpop.f32.mrb[0].mxu0
    %v506 = vadd.f32 0.0, %v505
    %v507 = vpop.f32.mrb[0].mxu0
    %v508 = vadd.f32 0.0, %v507
    %v509 = vpop.f32.mrb[0].mxu0
    %v510 = vpop.f32.mrb[0].mxu0
    %511 = vdwg.mxu0
    %v512 = vpack.c.bf16 %v465, %v465
    %v513 = vpack.c.bf16 %v467, %v467
    %v514 = vpack.c.bf16 %v506, %v506
    %v515 = vpack.c.bf16 %v508, %v508
    %v516 = vld [vmem:[#allocation5 + $0x200] sm:$0xff]
    %v517 = vld [vmem:[#allocation5 + $0x208] sm:$0xff]
    %v518 = vld [vmem:[#allocation5 + $0x210] sm:$0xff]
    %v519 = vld [vmem:[#allocation5 + $0x218] sm:$0xff]
    %v520 = vld [vmem:[#allocation5 + $0x220] sm:$0xff]
    %v521 = vld [vmem:[#allocation5 + $0x228] sm:$0xff]
    %v522 = vld [vmem:[#allocation5 + $0x230] sm:$0xff]
    %v523 = vld [vmem:[#allocation5 + $0x238] sm:$0xff]
    %v524 = vld [vmem:[#allocation5 + $0x240] sm:$0xff]
    %v525 = vld [vmem:[#allocation5 + $0x248] sm:$0xff]
    %v526 = vld [vmem:[#allocation5 + $0x250] sm:$0xff]
    %v527 = vld [vmem:[#allocation5 + $0x258] sm:$0xff]
    %v528 = vld [vmem:[#allocation5 + $0x260] sm:$0xff]
    %v529 = vld [vmem:[#allocation5 + $0x268] sm:$0xff]
    %v530 = vld [vmem:[#allocation5 + $0x270] sm:$0xff]
    %v531 = vld [vmem:[#allocation5 + $0x278] sm:$0xff]
    %v532 = vld [vmem:[#allocation5 + $0x280] sm:$0xff]
    %v533 = vld [vmem:[#allocation5 + $0x288] sm:$0xff]
    %v534 = vld [vmem:[#allocation5 + $0x290] sm:$0xff]
    %v535 = vld [vmem:[#allocation5 + $0x298] sm:$0xff]
    %v536 = vld [vmem:[#allocation5 + $0x2a0] sm:$0xff]
    %v537 = vld [vmem:[#allocation5 + $0x2a8] sm:$0xff]
    %v538 = vld [vmem:[#allocation5 + $0x2b0] sm:$0xff]
    %v539 = vld [vmem:[#allocation5 + $0x2b8] sm:$0xff]
    %v540 = vld [vmem:[#allocation5 + $0x2c0] sm:$0xff]
    %v541 = vld [vmem:[#allocation5 + $0x2c8] sm:$0xff]
    %v542 = vld [vmem:[#allocation5 + $0x2d0] sm:$0xff]
    %v543 = vld [vmem:[#allocation5 + $0x2d8] sm:$0xff]
    %v544 = vld [vmem:[#allocation5 + $0x2e0] sm:$0xff]
    %v545 = vld [vmem:[#allocation5 + $0x2e8] sm:$0xff]
    %v546 = vld [vmem:[#allocation5 + $0x2f0] sm:$0xff]
    %v547 = vld [vmem:[#allocation5 + $0x2f8] sm:$0xff]
    %v548 = vld [vmem:[#allocation5 + $0x300] sm:$0xff]
    %v549 = vld [vmem:[#allocation5 + $0x308] sm:$0xff]
    %v550 = vld [vmem:[#allocation5 + $0x310] sm:$0xff]
    %v551 = vld [vmem:[#allocation5 + $0x318] sm:$0xff]
    %v552 = vld [vmem:[#allocation5 + $0x320] sm:$0xff]
    %v553 = vld [vmem:[#allocation5 + $0x328] sm:$0xff]
    %v554 = vld [vmem:[#allocation5 + $0x330] sm:$0xff]
    %v555 = vld [vmem:[#allocation5 + $0x338] sm:$0xff]
    %v556 = vld [vmem:[#allocation5 + $0x340] sm:$0xff]
    %v557 = vld [vmem:[#allocation5 + $0x348] sm:$0xff]
    %v558 = vld [vmem:[#allocation5 + $0x350] sm:$0xff]
    %v559 = vld [vmem:[#allocation5 + $0x358] sm:$0xff]
    %v560 = vld [vmem:[#allocation5 + $0x360] sm:$0xff]
    %v561 = vld [vmem:[#allocation5 + $0x368] sm:$0xff]
    %v562 = vld [vmem:[#allocation5 + $0x370] sm:$0xff]
    %v563 = vld [vmem:[#allocation5 + $0x378] sm:$0xff]
    %v564 = vld [vmem:[#allocation5 + $0x380] sm:$0xff]
    %v565 = vld [vmem:[#allocation5 + $0x388] sm:$0xff]
    %v566 = vld [vmem:[#allocation5 + $0x390] sm:$0xff]
    %v567 = vld [vmem:[#allocation5 + $0x398] sm:$0xff]
    %v568 = vld [vmem:[#allocation5 + $0x3a0] sm:$0xff]
    %v569 = vld [vmem:[#allocation5 + $0x3a8] sm:$0xff]
    %v570 = vld [vmem:[#allocation5 + $0x3b0] sm:$0xff]
    %v571 = vld [vmem:[#allocation5 + $0x3b8] sm:$0xff]
    %v572 = vld [vmem:[#allocation5 + $0x3c0] sm:$0xff]
    %v573 = vld [vmem:[#allocation5 + $0x3c8] sm:$0xff]
    %v574 = vld [vmem:[#allocation5 + $0x3d0] sm:$0xff]
    %v575 = vld [vmem:[#allocation5 + $0x3d8] sm:$0xff]
    %v576 = vld [vmem:[#allocation5 + $0x3e0] sm:$0xff]
    %v577 = vld [vmem:[#allocation5 + $0x3e8] sm:$0xff]
    %v578 = vld [vmem:[#allocation5 + $0x3f0] sm:$0xff]
    %v579 = vld [vmem:[#allocation5 + $0x3f8] sm:$0xff]
    %v644 = vunpack.c.l.b16 %v516
    %v645 = vunpack.c.h.b16 %v516
    %v646 = vunpack.c.l.b16 %v517
    %v647 = vunpack.c.h.b16 %v517
    %v648 = vunpack.c.l.b16 %v518
    %v649 = vunpack.c.h.b16 %v518
    %v650 = vunpack.c.l.b16 %v519
    %v651 = vunpack.c.h.b16 %v519
    %v652 = vunpack.c.l.b16 %v520
    %v653 = vunpack.c.h.b16 %v520
    %v654 = vunpack.c.l.b16 %v521
    %v655 = vunpack.c.h.b16 %v521
    %v656 = vunpack.c.l.b16 %v522
    %v657 = vunpack.c.h.b16 %v522
    %v658 = vunpack.c.l.b16 %v523
    %v659 = vunpack.c.h.b16 %v523
    %v660 = vunpack.c.l.b16 %v524
    %v661 = vunpack.c.h.b16 %v524
    %v662 = vunpack.c.l.b16 %v525
    %v663 = vunpack.c.h.b16 %v525
    %v664 = vunpack.c.l.b16 %v526
    %v665 = vunpack.c.h.b16 %v526
    %v666 = vunpack.c.l.b16 %v527
    %v667 = vunpack.c.h.b16 %v527
    %v668 = vunpack.c.l.b16 %v528
    %v669 = vunpack.c.h.b16 %v528
    %v670 = vunpack.c.l.b16 %v529
    %v671 = vunpack.c.h.b16 %v529
    %v672 = vunpack.c.l.b16 %v530
    %v673 = vunpack.c.h.b16 %v530
    %v674 = vunpack.c.l.b16 %v531
    %v675 = vunpack.c.h.b16 %v531
    %v676 = vunpack.c.l.b16 %v532
    %v677 = vunpack.c.h.b16 %v532
    %v678 = vunpack.c.l.b16 %v533
    %v679 = vunpack.c.h.b16 %v533
    %v680 = vunpack.c.l.b16 %v534
    %v681 = vunpack.c.h.b16 %v534
    %v682 = vunpack.c.l.b16 %v535
    %v683 = vunpack.c.h.b16 %v535
    %v684 = vunpack.c.l.b16 %v536
    %v685 = vunpack.c.h.b16 %v536
    %v686 = vunpack.c.l.b16 %v537
    %v687 = vunpack.c.h.b16 %v537
    %v688 = vunpack.c.l.b16 %v538
    %v689 = vunpack.c.h.b16 %v538
    %v690 = vunpack.c.l.b16 %v539
    %v691 = vunpack.c.h.b16 %v539
    %v692 = vunpack.c.l.b16 %v540
    %v693 = vunpack.c.h.b16 %v540
    %v694 = vunpack.c.l.b16 %v541
    %v695 = vunpack.c.h.b16 %v541
    %v696 = vunpack.c.l.b16 %v542
    %v697 = vunpack.c.h.b16 %v542
    %v698 = vunpack.c.l.b16 %v543
    %v699 = vunpack.c.h.b16 %v543
    %v700 = vunpack.c.l.b16 %v544
    %v701 = vunpack.c.h.b16 %v544
    %v702 = vunpack.c.l.b16 %v545
    %v703 = vunpack.c.h.b16 %v545
    %v704 = vunpack.c.l.b16 %v546
    %v705 = vunpack.c.h.b16 %v546
    %v706 = vunpack.c.l.b16 %v547
    %v707 = vunpack.c.h.b16 %v547
    %v708 = vunpack.c.l.b16 %v548
    %v709 = vunpack.c.h.b16 %v548
    %v710 = vunpack.c.l.b16 %v549
    %v711 = vunpack.c.h.b16 %v549
    %v712 = vunpack.c.l.b16 %v550
    %v713 = vunpack.c.h.b16 %v550
    %v714 = vunpack.c.l.b16 %v551
    %v715 = vunpack.c.h.b16 %v551
    %v716 = vunpack.c.l.b16 %v552
    %v717 = vunpack.c.h.b16 %v552
    %v718 = vunpack.c.l.b16 %v553
    %v719 = vunpack.c.h.b16 %v553
    %v720 = vunpack.c.l.b16 %v554
    %v721 = vunpack.c.h.b16 %v554
    %v722 = vunpack.c.l.b16 %v555
    %v723 = vunpack.c.h.b16 %v555
    %v724 = vunpack.c.l.b16 %v556
    %v725 = vunpack.c.h.b16 %v556
    %v726 = vunpack.c.l.b16 %v557
    %v727 = vunpack.c.h.b16 %v557
    %v728 = vunpack.c.l.b16 %v558
    %v729 = vunpack.c.h.b16 %v558
    %v730 = vunpack.c.l.b16 %v559
    %v731 = vunpack.c.h.b16 %v559
    %v732 = vunpack.c.l.b16 %v560
    %v733 = vunpack.c.h.b16 %v560
    %v734 = vunpack.c.l.b16 %v561
    %v735 = vunpack.c.h.b16 %v561
    %v736 = vunpack.c.l.b16 %v562
    %v737 = vunpack.c.h.b16 %v562
    %v738 = vunpack.c.l.b16 %v563
    %v739 = vunpack.c.h.b16 %v563
    %v740 = vunpack.c.l.b16 %v564
    %v741 = vunpack.c.h.b16 %v564
    %v742 = vunpack.c.l.b16 %v565
    %v743 = vunpack.c.h.b16 %v565
    %v744 = vunpack.c.l.b16 %v566
    %v745 = vunpack.c.h.b16 %v566
    %v746 = vunpack.c.l.b16 %v567
    %v747 = vunpack.c.h.b16 %v567
    %v748 = vunpack.c.l.b16 %v568
    %v749 = vunpack.c.h.b16 %v568
    %v750 = vunpack.c.l.b16 %v569
    %v751 = vunpack.c.h.b16 %v569
    %v752 = vunpack.c.l.b16 %v570
    %v753 = vunpack.c.h.b16 %v570
    %v754 = vunpack.c.l.b16 %v571
    %v755 = vunpack.c.h.b16 %v571
    %v756 = vunpack.c.l.b16 %v572
    %v757 = vunpack.c.h.b16 %v572
    %v758 = vunpack.c.l.b16 %v573
    %v759 = vunpack.c.h.b16 %v573
    %v760 = vunpack.c.l.b16 %v574
    %v761 = vunpack.c.h.b16 %v574
    %v762 = vunpack.c.l.b16 %v575
    %v763 = vunpack.c.h.b16 %v575
    %v764 = vunpack.c.l.b16 %v576
    %v765 = vunpack.c.h.b16 %v576
    %v766 = vunpack.c.l.b16 %v577
    %v767 = vunpack.c.h.b16 %v577
    %v768 = vunpack.c.l.b16 %v578
    %v769 = vunpack.c.h.b16 %v578
    %v770 = vunpack.c.l.b16 %v579
    %v771 = vunpack.c.h.b16 %v579
    %v772 = vpack.c.b16 %v646, %v644
    %v773 = vpack.c.b16 %v647, %v645
    %v774 = vpack.c.b16 %v650, %v648
    %v775 = vpack.c.b16 %v651, %v649
    %v776 = vpack.c.b16 %v654, %v652
    %v777 = vpack.c.b16 %v655, %v653
    %v778 = vpack.c.b16 %v658, %v656
    %v779 = vpack.c.b16 %v659, %v657
    %v780 = vpack.c.b16 %v662, %v660
    %v781 = vpack.c.b16 %v663, %v661
    %v782 = vpack.c.b16 %v666, %v664
    %v783 = vpack.c.b16 %v667, %v665
    %v784 = vpack.c.b16 %v670, %v668
    %v785 = vpack.c.b16 %v671, %v669
    %v786 = vpack.c.b16 %v674, %v672
    %v787 = vpack.c.b16 %v675, %v673
    %v788 = vpack.c.b16 %v678, %v676
    %v789 = vpack.c.b16 %v679, %v677
    %v790 = vpack.c.b16 %v682, %v680
    %v791 = vpack.c.b16 %v683, %v681
    %v792 = vpack.c.b16 %v686, %v684
    %v793 = vpack.c.b16 %v687, %v685
    %v794 = vpack.c.b16 %v690, %v688
    %v795 = vpack.c.b16 %v691, %v689
    %v796 = vpack.c.b16 %v694, %v692
    %v797 = vpack.c.b16 %v695, %v693
    %v798 = vpack.c.b16 %v698, %v696
    %v799 = vpack.c.b16 %v699, %v697
    %v800 = vpack.c.b16 %v702, %v700
    %v801 = vpack.c.b16 %v703, %v701
    %v802 = vpack.c.b16 %v706, %v704
    %v803 = vpack.c.b16 %v707, %v705
    %v804 = vpack.c.b16 %v710, %v708
    %v805 = vpack.c.b16 %v711, %v709
    %v806 = vpack.c.b16 %v714, %v712
    %v807 = vpack.c.b16 %v715, %v713
    %v808 = vpack.c.b16 %v718, %v716
    %v809 = vpack.c.b16 %v719, %v717
    %v810 = vpack.c.b16 %v722, %v720
    %v811 = vpack.c.b16 %v723, %v721
    %v812 = vpack.c.b16 %v726, %v724
    %v813 = vpack.c.b16 %v727, %v725
    %v814 = vpack.c.b16 %v730, %v728
    %v815 = vpack.c.b16 %v731, %v729
    %v816 = vpack.c.b16 %v734, %v732
    %v817 = vpack.c.b16 %v735, %v733
    %v818 = vpack.c.b16 %v738, %v736
    %v819 = vpack.c.b16 %v739, %v737
    %v820 = vpack.c.b16 %v742, %v740
    %v821 = vpack.c.b16 %v743, %v741
    %v822 = vpack.c.b16 %v746, %v744
    %v823 = vpack.c.b16 %v747, %v745
    %v824 = vpack.c.b16 %v750, %v748
    %v825 = vpack.c.b16 %v751, %v749
    %v826 = vpack.c.b16 %v754, %v752
    %v827 = vpack.c.b16 %v755, %v753
    %v828 = vpack.c.b16 %v758, %v756
    %v829 = vpack.c.b16 %v759, %v757
    %v830 = vpack.c.b16 %v762, %v760
    %v831 = vpack.c.b16 %v763, %v761
    %v832 = vpack.c.b16 %v766, %v764
    %v833 = vpack.c.b16 %v767, %v765
    %v834 = vpack.c.b16 %v770, %v768
    %v835 = vpack.c.b16 %v771, %v769
    %900 = vmatprep.subr.bf16.mxu0 %v773
    %901 = vmatpush1.bf16.xpose.msra.mxu0 %v772
    %902 = vmatprep.subr.bf16.mxu0 %v775
    %903 = vmatpush1.bf16.xpose.msra.mxu0 %v774
    %904 = vmatprep.subr.bf16.mxu0 %v777
    %905 = vmatpush1.bf16.xpose.msra.mxu0 %v776
    %906 = vmatprep.subr.bf16.mxu0 %v779
    %907 = vmatpush1.bf16.xpose.msra.mxu0 %v778
    %908 = vmatprep.subr.bf16.mxu0 %v781
    %909 = vmatpush1.bf16.xpose.msra.mxu0 %v780
    %910 = vmatprep.subr.bf16.mxu0 %v783
    %911 = vmatpush1.bf16.xpose.msra.mxu0 %v782
    %912 = vmatprep.subr.bf16.mxu0 %v785
    %913 = vmatpush1.bf16.xpose.msra.mxu0 %v784
    %914 = vmatprep.subr.bf16.mxu0 %v787
    %915 = vmatpush1.bf16.xpose.msra.mxu0 %v786
    %916 = vmatprep.subr.bf16.mxu0 %v789
    %917 = vmatpush1.bf16.xpose.msra.mxu0 %v788
    %918 = vmatprep.subr.bf16.mxu0 %v791
    %919 = vmatpush1.bf16.xpose.msra.mxu0 %v790
    %920 = vmatprep.subr.bf16.mxu0 %v793
    %921 = vmatpush1.bf16.xpose.msra.mxu0 %v792
    %922 = vmatprep.subr.bf16.mxu0 %v795
    %923 = vmatpush1.bf16.xpose.msra.mxu0 %v794
    %924 = vmatprep.subr.bf16.mxu0 %v797
    %925 = vmatpush1.bf16.xpose.msra.mxu0 %v796
    %926 = vmatprep.subr.bf16.mxu0 %v799
    %927 = vmatpush1.bf16.xpose.msra.mxu0 %v798
    %928 = vmatprep.subr.bf16.mxu0 %v801
    %929 = vmatpush1.bf16.xpose.msra.mxu0 %v800
    %930 = vmatprep.subr.bf16.mxu0 %v803
    %931 = vmatpush1.bf16.xpose.msra.mxu0 %v802
    %932 = vmatprep.mubr.bf16.mxu0 %v107
    %933 = vmatmul.mubr.bf16.gmra.mrb[0].mxu0 %v106
    %v934 = vpop.f32.mrb[0].mxu0
    %v935 = vadd.f32 0.0, %v934
    %v936 = vpop.f32.mrb[0].mxu0
    %v937 = vadd.f32 0.0, %v936
    %v938 = vpop.f32.mrb[0].mxu0
    %v939 = vpop.f32.mrb[0].mxu0
    %940 = vdwg.mxu0
    %941 = vmatprep.subr.bf16.mxu0 %v805
    %942 = vmatpush1.bf16.xpose.msra.mxu0 %v804
    %943 = vmatprep.subr.bf16.mxu0 %v807
    %944 = vmatpush1.bf16.xpose.msra.mxu0 %v806
    %945 = vmatprep.subr.bf16.mxu0 %v809
    %946 = vmatpush1.bf16.xpose.msra.mxu0 %v808
    %947 = vmatprep.subr.bf16.mxu0 %v811
    %948 = vmatpush1.bf16.xpose.msra.mxu0 %v810
    %949 = vmatprep.subr.bf16.mxu0 %v813
    %950 = vmatpush1.bf16.xpose.msra.mxu0 %v812
    %951 = vmatprep.subr.bf16.mxu0 %v815
    %952 = vmatpush1.bf16.xpose.msra.mxu0 %v814
    %953 = vmatprep.subr.bf16.mxu0 %v817
    %954 = vmatpush1.bf16.xpose.msra.mxu0 %v816
    %955 = vmatprep.subr.bf16.mxu0 %v819
    %956 = vmatpush1.bf16.xpose.msra.mxu0 %v818
    %957 = vmatprep.subr.bf16.mxu0 %v821
    %958 = vmatpush1.bf16.xpose.msra.mxu0 %v820
    %959 = vmatprep.subr.bf16.mxu0 %v823
    %960 = vmatpush1.bf16.xpose.msra.mxu0 %v822
    %961 = vmatprep.subr.bf16.mxu0 %v825
    %962 = vmatpush1.bf16.xpose.msra.mxu0 %v824
    %963 = vmatprep.subr.bf16.mxu0 %v827
    %964 = vmatpush1.bf16.xpose.msra.mxu0 %v826
    %965 = vmatprep.subr.bf16.mxu0 %v829
    %966 = vmatpush1.bf16.xpose.msra.mxu0 %v828
    %967 = vmatprep.subr.bf16.mxu0 %v831
    %968 = vmatpush1.bf16.xpose.msra.mxu0 %v830
    %969 = vmatprep.subr.bf16.mxu0 %v833
    %970 = vmatpush1.bf16.xpose.msra.mxu0 %v832
    %971 = vmatprep.subr.bf16.mxu0 %v835
    %972 = vmatpush1.bf16.xpose.msra.mxu0 %v834
    %973 = vmatprep.mubr.bf16.mxu0 %v107
    %974 = vmatmul.mubr.bf16.gmra.mrb[0].mxu0 %v106
    %v975 = vpop.f32.mrb[0].mxu0
    %v976 = vadd.f32 0.0, %v975
    %v977 = vpop.f32.mrb[0].mxu0
    %v978 = vadd.f32 0.0, %v977
    %v979 = vpop.f32.mrb[0].mxu0
    %v980 = vpop.f32.mrb[0].mxu0
    %981 = vdwg.mxu0
    %v982 = vpack.c.bf16 %v935, %v935
    %v983 = vpack.c.bf16 %v937, %v937
    %v984 = vpack.c.bf16 %v976, %v976
    %v985 = vpack.c.bf16 %v978, %v978
    %986 = vmatprep.subr.bf16.mxu0 %v773
    %987 = vmatpush1.bf16.msra.mxu0 %v772
    %988 = vmatprep.subr.bf16.mxu0 %v775
    %989 = vmatpush1.bf16.msra.mxu0 %v774
    %990 = vmatprep.subr.bf16.mxu0 %v777
    %991 = vmatpush1.bf16.msra.mxu0 %v776
    %992 = vmatprep.subr.bf16.mxu0 %v779
    %993 = vmatpush1.bf16.msra.mxu0 %v778
    %994 = vmatprep.subr.bf16.mxu0 %v781
    %995 = vmatpush1.bf16.msra.mxu0 %v780
    %996 = vmatprep.subr.bf16.mxu0 %v783
    %997 = vmatpush1.bf16.msra.mxu0 %v782
    %998 = vmatprep.subr.bf16.mxu0 %v785
    %999 = vmatpush1.bf16.msra.mxu0 %v784
    %1000 = vmatprep.subr.bf16.mxu0 %v787
    %1001 = vmatpush1.bf16.msra.mxu0 %v786
    %1002 = vmatprep.subr.bf16.mxu0 %v789
    %1003 = vmatpush1.bf16.msra.mxu0 %v788
    %1004 = vmatprep.subr.bf16.mxu0 %v791
    %1005 = vmatpush1.bf16.msra.mxu0 %v790
    %1006 = vmatprep.subr.bf16.mxu0 %v793
    %1007 = vmatpush1.bf16.msra.mxu0 %v792
    %1008 = vmatprep.subr.bf16.mxu0 %v795
    %1009 = vmatpush1.bf16.msra.mxu0 %v794
    %1010 = vmatprep.subr.bf16.mxu0 %v797
    %1011 = vmatpush1.bf16.msra.mxu0 %v796
    %1012 = vmatprep.subr.bf16.mxu0 %v799
    %1013 = vmatpush1.bf16.msra.mxu0 %v798
    %1014 = vmatprep.subr.bf16.mxu0 %v801
    %1015 = vmatpush1.bf16.msra.mxu0 %v800
    %1016 = vmatprep.subr.bf16.mxu0 %v803
    %1017 = vmatpush1.bf16.msra.mxu0 %v802
    %1018 = vmatprep.mubr.bf16.mxu0 %v983
    %1019 = vmatmul.mubr.bf16.gmra.mrb[0].mxu0 %v982
    %v1020 = vpop.f32.mrb[0].mxu0
    %v1021 = vadd.f32 0.0, %v1020
    %v1022 = vpop.f32.mrb[0].mxu0
    %v1023 = vadd.f32 0.0, %v1022
    %v1024 = vpop.f32.mrb[0].mxu0
    %v1025 = vpop.f32.mrb[0].mxu0
    %1026 = vdwg.mxu0
    %1027 = vmatprep.subr.bf16.mxu0 %v805
    %1028 = vmatpush1.bf16.msra.mxu0 %v804
    %1029 = vmatprep.subr.bf16.mxu0 %v807
    %1030 = vmatpush1.bf16.msra.mxu0 %v806
    %1031 = vmatprep.subr.bf16.mxu0 %v809
    %1032 = vmatpush1.bf16.msra.mxu0 %v808
    %1033 = vmatprep.subr.bf16.mxu0 %v811
    %1034 = vmatpush1.bf16.msra.mxu0 %v810
    %1035 = vmatprep.subr.bf16.mxu0 %v813
    %1036 = vmatpush1.bf16.msra.mxu0 %v812
    %1037 = vmatprep.subr.bf16.mxu0 %v815
    %1038 = vmatpush1.bf16.msra.mxu0 %v814
    %1039 = vmatprep.subr.bf16.mxu0 %v817
    %1040 = vmatpush1.bf16.msra.mxu0 %v816
    %1041 = vmatprep.subr.bf16.mxu0 %v819
    %1042 = vmatpush1.bf16.msra.mxu0 %v818
    %1043 = vmatprep.subr.bf16.mxu0 %v821
    %1044 = vmatpush1.bf16.msra.mxu0 %v820
    %1045 = vmatprep.subr.bf16.mxu0 %v823
    %1046 = vmatpush1.bf16.msra.mxu0 %v822
    %1047 = vmatprep.subr.bf16.mxu0 %v825
    %1048 = vmatpush1.bf16.msra.mxu0 %v824
    %1049 = vmatprep.subr.bf16.mxu0 %v827
    %1050 = vmatpush1.bf16.msra.mxu0 %v826
    %1051 = vmatprep.subr.bf16.mxu0 %v829
    %1052 = vmatpush1.bf16.msra.mxu0 %v828
    %1053 = vmatprep.subr.bf16.mxu0 %v831
    %1054 = vmatpush1.bf16.msra.mxu0 %v830
    %1055 = vmatprep.subr.bf16.mxu0 %v833
    %1056 = vmatpush1.bf16.msra.mxu0 %v832
    %1057 = vmatprep.subr.bf16.mxu0 %v835
    %1058 = vmatpush1.bf16.msra.mxu0 %v834
    %1059 = vmatprep.mubr.bf16.mxu0 %v985
    %1060 = vmatmul.mubr.bf16.gmra.mrb[0].mxu0 %v984
    %v1061 = vpop.f32.mrb[0].mxu0
    %v1062 = vadd.f32 %v1021, %v1061
    %v1063 = vpop.f32.mrb[0].mxu0
    %v1064 = vadd.f32 %v1023, %v1063
    %v1065 = vpop.f32.mrb[0].mxu0
    %v1066 = vpop.f32.mrb[0].mxu0
    %1067 = vdwg.mxu0
    %1068 = vmatprep.subr.bf16.mxu0 %v303
    %1069 = vmatpush1.bf16.msra.mxu0 %v302
    %1070 = vmatprep.subr.bf16.mxu0 %v305
    %1071 = vmatpush1.bf16.msra.mxu0 %v304
    %1072 = vmatprep.subr.bf16.mxu0 %v307
    %1073 = vmatpush1.bf16.msra.mxu0 %v306
    %1074 = vmatprep.subr.bf16.mxu0 %v309
    %1075 = vmatpush1.bf16.msra.mxu0 %v308
    %1076 = vmatprep.subr.bf16.mxu0 %v311
    %1077 = vmatpush1.bf16.msra.mxu0 %v310
    %1078 = vmatprep.subr.bf16.mxu0 %v313
    %1079 = vmatpush1.bf16.msra.mxu0 %v312
    %1080 = vmatprep.subr.bf16.mxu0 %v315
    %1081 = vmatpush1.bf16.msra.mxu0 %v314
    %1082 = vmatprep.subr.bf16.mxu0 %v317
    %1083 = vmatpush1.bf16.msra.mxu0 %v316
    %1084 = vmatprep.subr.bf16.mxu0 %v319
    %1085 = vmatpush1.bf16.msra.mxu0 %v318
    %1086 = vmatprep.subr.bf16.mxu0 %v321
    %1087 = vmatpush1.bf16.msra.mxu0 %v320
    %1088 = vmatprep.subr.bf16.mxu0 %v323
    %1089 = vmatpush1.bf16.msra.mxu0 %v322
    %1090 = vmatprep.subr.bf16.mxu0 %v325
    %1091 = vmatpush1.bf16.msra.mxu0 %v324
    %1092 = vmatprep.subr.bf16.mxu0 %v327
    %1093 = vmatpush1.bf16.msra.mxu0 %v326
    %1094 = vmatprep.subr.bf16.mxu0 %v329
    %1095 = vmatpush1.bf16.msra.mxu0 %v328
    %1096 = vmatprep.subr.bf16.mxu0 %v331
    %1097 = vmatpush1.bf16.msra.mxu0 %v330
    %1098 = vmatprep.subr.bf16.mxu0 %v333
    %1099 = vmatpush1.bf16.msra.mxu0 %v332
    %1100 = vmatprep.mubr.bf16.mxu0 %v513
    %1101 = vmatmul.mubr.bf16.gmra.mrb[0].mxu0 %v512
    %v1102 = vpop.f32.mrb[0].mxu0
    %v1103 = vadd.f32 %v1062, %v1102
    %v1104 = vpop.f32.mrb[0].mxu0
    %v1105 = vadd.f32 %v1064, %v1104
    %v1106 = vpop.f32.mrb[0].mxu0
    %v1107 = vpop.f32.mrb[0].mxu0
    %1108 = vdwg.mxu0
    %1109 = vmatprep.subr.bf16.mxu0 %v335
    %1110 = vmatpush1.bf16.msra.mxu0 %v334
    %1111 = vmatprep.subr.bf16.mxu0 %v337
    %1112 = vmatpush1.bf16.msra.mxu0 %v336
    %1113 = vmatprep.subr.bf16.mxu0 %v339
    %1114 = vmatpush1.bf16.msra.mxu0 %v338
    %1115 = vmatprep.subr.bf16.mxu0 %v341
    %1116 = vmatpush1.bf16.msra.mxu0 %v340
    %1117 = vmatprep.subr.bf16.mxu0 %v343
    %1118 = vmatpush1.bf16.msra.mxu0 %v342
    %1119 = vmatprep.subr.bf16.mxu0 %v345
    %1120 = vmatpush1.bf16.msra.mxu0 %v344
    %1121 = vmatprep.subr.bf16.mxu0 %v347
    %1122 = vmatpush1.bf16.msra.mxu0 %v346
    %1123 = vmatprep.subr.bf16.mxu0 %v349
    %1124 = vmatpush1.bf16.msra.mxu0 %v348
    %1125 = vmatprep.subr.bf16.mxu0 %v351
    %1126 = vmatpush1.bf16.msra.mxu0 %v350
    %1127 = vmatprep.subr.bf16.mxu0 %v353
    %1128 = vmatpush1.bf16.msra.mxu0 %v352
    %1129 = vmatprep.subr.bf16.mxu0 %v355
    %1130 = vmatpush1.bf16.msra.mxu0 %v354
    %1131 = vmatprep.subr.bf16.mxu0 %v357
    %1132 = vmatpush1.bf16.msra.mxu0 %v356
    %1133 = vmatprep.subr.bf16.mxu0 %v359
    %1134 = vmatpush1.bf16.msra.mxu0 %v358
    %1135 = vmatprep.subr.bf16.mxu0 %v361
    %1136 = vmatpush1.bf16.msra.mxu0 %v360
    %1137 = vmatprep.subr.bf16.mxu0 %v363
    %1138 = vmatpush1.bf16.msra.mxu0 %v362
    %1139 = vmatprep.subr.bf16.mxu0 %v365
    %1140 = vmatpush1.bf16.msra.mxu0 %v364
    %1141 = vmatprep.mubr.bf16.mxu0 %v515
    %1142 = vmatmul.mubr.bf16.gmra.mrb[0].mxu0 %v514
    %v1143 = vpop.f32.mrb[0].mxu0
    %v1144 = vadd.f32 %v1103, %v1143
    %v1145 = vpop.f32.mrb[0].mxu0
    %v1146 = vadd.f32 %v1105, %v1145
    %v1147 = vpop.f32.mrb[0].mxu0
    %v1148 = vpop.f32.mrb[0].mxu0
    %1149 = vdwg.mxu0
    %v1150 = vld [vmem:[#allocation5 + $0x400] sm:$0xff]
    %v1151 = vld [vmem:[#allocation5 + $0x408] sm:$0xff]
    %v1152 = vld [vmem:[#allocation5 + $0x410] sm:$0xff]
    %v1153 = vld [vmem:[#allocation5 + $0x418] sm:$0xff]
    %v1154 = vld [vmem:[#allocation5 + $0x420] sm:$0xff]
    %v1155 = vld [vmem:[#allocation5 + $0x428] sm:$0xff]
    %v1156 = vld [vmem:[#allocation5 + $0x430] sm:$0xff]
    %v1157 = vld [vmem:[#allocation5 + $0x438] sm:$0xff]
    %v1158 = vld [vmem:[#allocation5 + $0x440] sm:$0xff]
    %v1159 = vld [vmem:[#allocation5 + $0x448] sm:$0xff]
    %v1160 = vld [vmem:[#allocation5 + $0x450] sm:$0xff]
    %v1161 = vld [vmem:[#allocation5 + $0x458] sm:$0xff]
    %v1162 = vld [vmem:[#allocation5 + $0x460] sm:$0xff]
    %v1163 = vld [vmem:[#allocation5 + $0x468] sm:$0xff]
    %v1164 = vld [vmem:[#allocation5 + $0x470] sm:$0xff]
    %v1165 = vld [vmem:[#allocation5 + $0x478] sm:$0xff]
    %v1166 = vld [vmem:[#allocation5 + $0x480] sm:$0xff]
    %v1167 = vld [vmem:[#allocation5 + $0x488] sm:$0xff]
    %v1168 = vld [vmem:[#allocation5 + $0x490] sm:$0xff]
    %v1169 = vld [vmem:[#allocation5 + $0x498] sm:$0xff]
    %v1170 = vld [vmem:[#allocation5 + $0x4a0] sm:$0xff]
    %v1171 = vld [vmem:[#allocation5 + $0x4a8] sm:$0xff]
    %v1172 = vld [vmem:[#allocation5 + $0x4b0] sm:$0xff]
    %v1173 = vld [vmem:[#allocation5 + $0x4b8] sm:$0xff]
    %v1174 = vld [vmem:[#allocation5 + $0x4c0] sm:$0xff]
    %v1175 = vld [vmem:[#allocation5 + $0x4c8] sm:$0xff]
    %v1176 = vld [vmem:[#allocation5 + $0x4d0] sm:$0xff]
    %v1177 = vld [vmem:[#allocation5 + $0x4d8] sm:$0xff]
    %v1178 = vld [vmem:[#allocation5 + $0x4e0] sm:$0xff]
    %v1179 = vld [vmem:[#allocation5 + $0x4e8] sm:$0xff]
    %v1180 = vld [vmem:[#allocation5 + $0x4f0] sm:$0xff]
    %v1181 = vld [vmem:[#allocation5 + $0x4f8] sm:$0xff]
    %v1182 = vld [vmem:[#allocation5 + $0x500] sm:$0xff]
    %v1183 = vld [vmem:[#allocation5 + $0x508] sm:$0xff]
    %v1184 = vld [vmem:[#allocation5 + $0x510] sm:$0xff]
    %v1185 = vld [vmem:[#allocation5 + $0x518] sm:$0xff]
    %v1186 = vld [vmem:[#allocation5 + $0x520] sm:$0xff]
    %v1187 = vld [vmem:[#allocation5 + $0x528] sm:$0xff]
    %v1188 = vld [vmem:[#allocation5 + $0x530] sm:$0xff]
    %v1189 = vld [vmem:[#allocation5 + $0x538] sm:$0xff]
    %v1190 = vld [vmem:[#allocation5 + $0x540] sm:$0xff]
    %v1191 = vld [vmem:[#allocation5 + $0x548] sm:$0xff]
    %v1192 = vld [vmem:[#allocation5 + $0x550] sm:$0xff]
    %v1193 = vld [vmem:[#allocation5 + $0x558] sm:$0xff]
    %v1194 = vld [vmem:[#allocation5 + $0x560] sm:$0xff]
    %v1195 = vld [vmem:[#allocation5 + $0x568] sm:$0xff]
    %v1196 = vld [vmem:[#allocation5 + $0x570] sm:$0xff]
    %v1197 = vld [vmem:[#allocation5 + $0x578] sm:$0xff]
    %v1198 = vld [vmem:[#allocation5 + $0x580] sm:$0xff]
    %v1199 = vld [vmem:[#allocation5 + $0x588] sm:$0xff]
    %v1200 = vld [vmem:[#allocation5 + $0x590] sm:$0xff]
    %v1201 = vld [vmem:[#allocation5 + $0x598] sm:$0xff]
    %v1202 = vld [vmem:[#allocation5 + $0x5a0] sm:$0xff]
    %v1203 = vld [vmem:[#allocation5 + $0x5a8] sm:$0xff]
    %v1204 = vld [vmem:[#allocation5 + $0x5b0] sm:$0xff]
    %v1205 = vld [vmem:[#allocation5 + $0x5b8] sm:$0xff]
    %v1206 = vld [vmem:[#allocation5 + $0x5c0] sm:$0xff]
    %v1207 = vld [vmem:[#allocation5 + $0x5c8] sm:$0xff]
    %v1208 = vld [vmem:[#allocation5 + $0x5d0] sm:$0xff]
    %v1209 = vld [vmem:[#allocation5 + $0x5d8] sm:$0xff]
    %v1210 = vld [vmem:[#allocation5 + $0x5e0] sm:$0xff]
    %v1211 = vld [vmem:[#allocation5 + $0x5e8] sm:$0xff]
    %v1212 = vld [vmem:[#allocation5 + $0x5f0] sm:$0xff]
    %v1213 = vld [vmem:[#allocation5 + $0x5f8] sm:$0xff]
    %v1278 = vunpack.c.l.b16 %v1150
    %v1279 = vunpack.c.h.b16 %v1150
    %v1280 = vunpack.c.l.b16 %v1151
    %v1281 = vunpack.c.h.b16 %v1151
    %v1282 = vunpack.c.l.b16 %v1152
    %v1283 = vunpack.c.h.b16 %v1152
    %v1284 = vunpack.c.l.b16 %v1153
    %v1285 = vunpack.c.h.b16 %v1153
    %v1286 = vunpack.c.l.b16 %v1154
    %v1287 = vunpack.c.h.b16 %v1154
    %v1288 = vunpack.c.l.b16 %v1155
    %v1289 = vunpack.c.h.b16 %v1155
    %v1290 = vunpack.c.l.b16 %v1156
    %v1291 = vunpack.c.h.b16 %v1156
    %v1292 = vunpack.c.l.b16 %v1157
    %v1293 = vunpack.c.h.b16 %v1157
    %v1294 = vunpack.c.l.b16 %v1158
    %v1295 = vunpack.c.h.b16 %v1158
    %v1296 = vunpack.c.l.b16 %v1159
    %v1297 = vunpack.c.h.b16 %v1159
    %v1298 = vunpack.c.l.b16 %v1160
    %v1299 = vunpack.c.h.b16 %v1160
    %v1300 = vunpack.c.l.b16 %v1161
    %v1301 = vunpack.c.h.b16 %v1161
    %v1302 = vunpack.c.l.b16 %v1162
    %v1303 = vunpack.c.h.b16 %v1162
    %v1304 = vunpack.c.l.b16 %v1163
    %v1305 = vunpack.c.h.b16 %v1163
    %v1306 = vunpack.c.l.b16 %v1164
    %v1307 = vunpack.c.h.b16 %v1164
    %v1308 = vunpack.c.l.b16 %v1165
    %v1309 = vunpack.c.h.b16 %v1165
    %v1310 = vunpack.c.l.b16 %v1166
    %v1311 = vunpack.c.h.b16 %v1166
    %v1312 = vunpack.c.l.b16 %v1167
    %v1313 = vunpack.c.h.b16 %v1167
    %v1314 = vunpack.c.l.b16 %v1168
    %v1315 = vunpack.c.h.b16 %v1168
    %v1316 = vunpack.c.l.b16 %v1169
    %v1317 = vunpack.c.h.b16 %v1169
    %v1318 = vunpack.c.l.b16 %v1170
    %v1319 = vunpack.c.h.b16 %v1170
    %v1320 = vunpack.c.l.b16 %v1171
    %v1321 = vunpack.c.h.b16 %v1171
    %v1322 = vunpack.c.l.b16 %v1172
    %v1323 = vunpack.c.h.b16 %v1172
    %v1324 = vunpack.c.l.b16 %v1173
    %v1325 = vunpack.c.h.b16 %v1173
    %v1326 = vunpack.c.l.b16 %v1174
    %v1327 = vunpack.c.h.b16 %v1174
    %v1328 = vunpack.c.l.b16 %v1175
    %v1329 = vunpack.c.h.b16 %v1175
    %v1330 = vunpack.c.l.b16 %v1176
    %v1331 = vunpack.c.h.b16 %v1176
    %v1332 = vunpack.c.l.b16 %v1177
    %v1333 = vunpack.c.h.b16 %v1177
    %v1334 = vunpack.c.l.b16 %v1178
    %v1335 = vunpack.c.h.b16 %v1178
    %v1336 = vunpack.c.l.b16 %v1179
    %v1337 = vunpack.c.h.b16 %v1179
    %v1338 = vunpack.c.l.b16 %v1180
    %v1339 = vunpack.c.h.b16 %v1180
    %v1340 = vunpack.c.l.b16 %v1181
    %v1341 = vunpack.c.h.b16 %v1181
    %v1342 = vunpack.c.l.b16 %v1182
    %v1343 = vunpack.c.h.b16 %v1182
    %v1344 = vunpack.c.l.b16 %v1183
    %v1345 = vunpack.c.h.b16 %v1183
    %v1346 = vunpack.c.l.b16 %v1184
    %v1347 = vunpack.c.h.b16 %v1184
    %v1348 = vunpack.c.l.b16 %v1185
    %v1349 = vunpack.c.h.b16 %v1185
    %v1350 = vunpack.c.l.b16 %v1186
    %v1351 = vunpack.c.h.b16 %v1186
    %v1352 = vunpack.c.l.b16 %v1187
    %v1353 = vunpack.c.h.b16 %v1187
    %v1354 = vunpack.c.l.b16 %v1188
    %v1355 = vunpack.c.h.b16 %v1188
    %v1356 = vunpack.c.l.b16 %v1189
    %v1357 = vunpack.c.h.b16 %v1189
    %v1358 = vunpack.c.l.b16 %v1190
    %v1359 = vunpack.c.h.b16 %v1190
    %v1360 = vunpack.c.l.b16 %v1191
    %v1361 = vunpack.c.h.b16 %v1191
    %v1362 = vunpack.c.l.b16 %v1192
    %v1363 = vunpack.c.h.b16 %v1192
    %v1364 = vunpack.c.l.b16 %v1193
    %v1365 = vunpack.c.h.b16 %v1193
    %v1366 = vunpack.c.l.b16 %v1194
    %v1367 = vunpack.c.h.b16 %v1194
    %v1368 = vunpack.c.l.b16 %v1195
    %v1369 = vunpack.c.h.b16 %v1195
    %v1370 = vunpack.c.l.b16 %v1196
    %v1371 = vunpack.c.h.b16 %v1196
    %v1372 = vunpack.c.l.b16 %v1197
    %v1373 = vunpack.c.h.b16 %v1197
    %v1374 = vunpack.c.l.b16 %v1198
    %v1375 = vunpack.c.h.b16 %v1198
    %v1376 = vunpack.c.l.b16 %v1199
    %v1377 = vunpack.c.h.b16 %v1199
    %v1378 = vunpack.c.l.b16 %v1200
    %v1379 = vunpack.c.h.b16 %v1200
    %v1380 = vunpack.c.l.b16 %v1201
    %v1381 = vunpack.c.h.b16 %v1201
    %v1382 = vunpack.c.l.b16 %v1202
    %v1383 = vunpack.c.h.b16 %v1202
    %v1384 = vunpack.c.l.b16 %v1203
    %v1385 = vunpack.c.h.b16 %v1203
    %v1386 = vunpack.c.l.b16 %v1204
    %v1387 = vunpack.c.h.b16 %v1204
    %v1388 = vunpack.c.l.b16 %v1205
    %v1389 = vunpack.c.h.b16 %v1205
    %v1390 = vunpack.c.l.b16 %v1206
    %v1391 = vunpack.c.h.b16 %v1206
    %v1392 = vunpack.c.l.b16 %v1207
    %v1393 = vunpack.c.h.b16 %v1207
    %v1394 = vunpack.c.l.b16 %v1208
    %v1395 = vunpack.c.h.b16 %v1208
    %v1396 = vunpack.c.l.b16 %v1209
    %v1397 = vunpack.c.h.b16 %v1209
    %v1398 = vunpack.c.l.b16 %v1210
    %v1399 = vunpack.c.h.b16 %v1210
    %v1400 = vunpack.c.l.b16 %v1211
    %v1401 = vunpack.c.h.b16 %v1211
    %v1402 = vunpack.c.l.b16 %v1212
    %v1403 = vunpack.c.h.b16 %v1212
    %v1404 = vunpack.c.l.b16 %v1213
    %v1405 = vunpack.c.h.b16 %v1213
    %v1406 = vpack.c.b16 %v1280, %v1278
    %v1407 = vpack.c.b16 %v1281, %v1279
    %v1408 = vpack.c.b16 %v1284, %v1282
    %v1409 = vpack.c.b16 %v1285, %v1283
    %v1410 = vpack.c.b16 %v1288, %v1286
    %v1411 = vpack.c.b16 %v1289, %v1287
    %v1412 = vpack.c.b16 %v1292, %v1290
    %v1413 = vpack.c.b16 %v1293, %v1291
    %v1414 = vpack.c.b16 %v1296, %v1294
    %v1415 = vpack.c.b16 %v1297, %v1295
    %v1416 = vpack.c.b16 %v1300, %v1298
    %v1417 = vpack.c.b16 %v1301, %v1299
    %v1418 = vpack.c.b16 %v1304, %v1302
    %v1419 = vpack.c.b16 %v1305, %v1303
    %v1420 = vpack.c.b16 %v1308, %v1306
    %v1421 = vpack.c.b16 %v1309, %v1307
    %v1422 = vpack.c.b16 %v1312, %v1310
    %v1423 = vpack.c.b16 %v1313, %v1311
    %v1424 = vpack.c.b16 %v1316, %v1314
    %v1425 = vpack.c.b16 %v1317, %v1315
    %v1426 = vpack.c.b16 %v1320, %v1318
    %v1427 = vpack.c.b16 %v1321, %v1319
    %v1428 = vpack.c.b16 %v1324, %v1322
    %v1429 = vpack.c.b16 %v1325, %v1323
    %v1430 = vpack.c.b16 %v1328, %v1326
    %v1431 = vpack.c.b16 %v1329, %v1327
    %v1432 = vpack.c.b16 %v1332, %v1330
    %v1433 = vpack.c.b16 %v1333, %v1331
    %v1434 = vpack.c.b16 %v1336, %v1334
    %v1435 = vpack.c.b16 %v1337, %v1335
    %v1436 = vpack.c.b16 %v1340, %v1338
    %v1437 = vpack.c.b16 %v1341, %v1339
    %v1438 = vpack.c.b16 %v1344, %v1342
    %v1439 = vpack.c.b16 %v1345, %v1343
    %v1440 = vpack.c.b16 %v1348, %v1346
    %v1441 = vpack.c.b16 %v1349, %v1347
    %v1442 = vpack.c.b16 %v1352, %v1350
    %v1443 = vpack.c.b16 %v1353, %v1351
    %v1444 = vpack.c.b16 %v1356, %v1354
    %v1445 = vpack.c.b16 %v1357, %v1355
    %v1446 = vpack.c.b16 %v1360, %v1358
    %v1447 = vpack.c.b16 %v1361, %v1359
    %v1448 = vpack.c.b16 %v1364, %v1362
    %v1449 = vpack.c.b16 %v1365, %v1363
    %v1450 = vpack.c.b16 %v1368, %v1366
    %v1451 = vpack.c.b16 %v1369, %v1367
    %v1452 = vpack.c.b16 %v1372, %v1370
    %v1453 = vpack.c.b16 %v1373, %v1371
    %v1454 = vpack.c.b16 %v1376, %v1374
    %v1455 = vpack.c.b16 %v1377, %v1375
    %v1456 = vpack.c.b16 %v1380, %v1378
    %v1457 = vpack.c.b16 %v1381, %v1379
    %v1458 = vpack.c.b16 %v1384, %v1382
    %v1459 = vpack.c.b16 %v1385, %v1383
    %v1460 = vpack.c.b16 %v1388, %v1386
    %v1461 = vpack.c.b16 %v1389, %v1387
    %v1462 = vpack.c.b16 %v1392, %v1390
    %v1463 = vpack.c.b16 %v1393, %v1391
    %v1464 = vpack.c.b16 %v1396, %v1394
    %v1465 = vpack.c.b16 %v1397, %v1395
    %v1466 = vpack.c.b16 %v1400, %v1398
    %v1467 = vpack.c.b16 %v1401, %v1399
    %v1468 = vpack.c.b16 %v1404, %v1402
    %v1469 = vpack.c.b16 %v1405, %v1403
    %1534 = vmatprep.subr.bf16.mxu0 %v1407
    %1535 = vmatpush1.bf16.xpose.msra.mxu0 %v1406
    %1536 = vmatprep.subr.bf16.mxu0 %v1409
    %1537 = vmatpush1.bf16.xpose.msra.mxu0 %v1408
    %1538 = vmatprep.subr.bf16.mxu0 %v1411
    %1539 = vmatpush1.bf16.xpose.msra.mxu0 %v1410
    %1540 = vmatprep.subr.bf16.mxu0 %v1413
    %1541 = vmatpush1.bf16.xpose.msra.mxu0 %v1412
    %1542 = vmatprep.subr.bf16.mxu0 %v1415
    %1543 = vmatpush1.bf16.xpose.msra.mxu0 %v1414
    %1544 = vmatprep.subr.bf16.mxu0 %v1417
    %1545 = vmatpush1.bf16.xpose.msra.mxu0 %v1416
    %1546 = vmatprep.subr.bf16.mxu0 %v1419
    %1547 = vmatpush1.bf16.xpose.msra.mxu0 %v1418
    %1548 = vmatprep.subr.bf16.mxu0 %v1421
    %1549 = vmatpush1.bf16.xpose.msra.mxu0 %v1420
    %1550 = vmatprep.subr.bf16.mxu0 %v1423
    %1551 = vmatpush1.bf16.xpose.msra.mxu0 %v1422
    %1552 = vmatprep.subr.bf16.mxu0 %v1425
    %1553 = vmatpush1.bf16.xpose.msra.mxu0 %v1424
    %1554 = vmatprep.subr.bf16.mxu0 %v1427
    %1555 = vmatpush1.bf16.xpose.msra.mxu0 %v1426
    %1556 = vmatprep.subr.bf16.mxu0 %v1429
    %1557 = vmatpush1.bf16.xpose.msra.mxu0 %v1428
    %1558 = vmatprep.subr.bf16.mxu0 %v1431
    %1559 = vmatpush1.bf16.xpose.msra.mxu0 %v1430
    %1560 = vmatprep.subr.bf16.mxu0 %v1433
    %1561 = vmatpush1.bf16.xpose.msra.mxu0 %v1432
    %1562 = vmatprep.subr.bf16.mxu0 %v1435
    %1563 = vmatpush1.bf16.xpose.msra.mxu0 %v1434
    %1564 = vmatprep.subr.bf16.mxu0 %v1437
    %1565 = vmatpush1.bf16.xpose.msra.mxu0 %v1436
    %1566 = vmatprep.mubr.bf16.mxu0 %v107
    %1567 = vmatmul.mubr.bf16.gmra.mrb[0].mxu0 %v106
    %v1568 = vpop.f32.mrb[0].mxu0
    %v1569 = vadd.f32 0.0, %v1568
    %v1570 = vpop.f32.mrb[0].mxu0
    %v1571 = vadd.f32 0.0, %v1570
    %v1572 = vpop.f32.mrb[0].mxu0
    %v1573 = vpop.f32.mrb[0].mxu0
    %1574 = vdwg.mxu0
    %1575 = vmatprep.subr.bf16.mxu0 %v1439
    %1576 = vmatpush1.bf16.xpose.msra.mxu0 %v1438
    %1577 = vmatprep.subr.bf16.mxu0 %v1441
    %1578 = vmatpush1.bf16.xpose.msra.mxu0 %v1440
    %1579 = vmatprep.subr.bf16.mxu0 %v1443
    %1580 = vmatpush1.bf16.xpose.msra.mxu0 %v1442
    %1581 = vmatprep.subr.bf16.mxu0 %v1445
    %1582 = vmatpush1.bf16.xpose.msra.mxu0 %v1444
    %1583 = vmatprep.subr.bf16.mxu0 %v1447
    %1584 = vmatpush1.bf16.xpose.msra.mxu0 %v1446
    %1585 = vmatprep.subr.bf16.mxu0 %v1449
    %1586 = vmatpush1.bf16.xpose.msra.mxu0 %v1448
    %1587 = vmatprep.subr.bf16.mxu0 %v1451
    %1588 = vmatpush1.bf16.xpose.msra.mxu0 %v1450
    %1589 = vmatprep.subr.bf16.mxu0 %v1453
    %1590 = vmatpush1.bf16.xpose.msra.mxu0 %v1452
    %1591 = vmatprep.subr.bf16.mxu0 %v1455
    %1592 = vmatpush1.bf16.xpose.msra.mxu0 %v1454
    %1593 = vmatprep.subr.bf16.mxu0 %v1457
    %1594 = vmatpush1.bf16.xpose.msra.mxu0 %v1456
    %1595 = vmatprep.subr.bf16.mxu0 %v1459
    %1596 = vmatpush1.bf16.xpose.msra.mxu0 %v1458
    %1597 = vmatprep.subr.bf16.mxu0 %v1461
    %1598 = vmatpush1.bf16.xpose.msra.mxu0 %v1460
    %1599 = vmatprep.subr.bf16.mxu0 %v1463
    %1600 = vmatpush1.bf16.xpose.msra.mxu0 %v1462
    %1601 = vmatprep.subr.bf16.mxu0 %v1465
    %1602 = vmatpush1.bf16.xpose.msra.mxu0 %v1464
    %1603 = vmatprep.subr.bf16.mxu0 %v1467
    %1604 = vmatpush1.bf16.xpose.msra.mxu0 %v1466
    %1605 = vmatprep.subr.bf16.mxu0 %v1469
    %1606 = vmatpush1.bf16.xpose.msra.mxu0 %v1468
    %1607 = vmatprep.mubr.bf16.mxu0 %v107
    %1608 = vmatmul.mubr.bf16.gmra.mrb[0].mxu0 %v106
    %v1609 = vpop.f32.mrb[0].mxu0
    %v1610 = vadd.f32 0.0, %v1609
    %v1611 = vpop.f32.mrb[0].mxu0
    %v1612 = vadd.f32 0.0, %v1611
    %v1613 = vpop.f32.mrb[0].mxu0
    %v1614 = vpop.f32.mrb[0].mxu0
    %1615 = vdwg.mxu0
    %v1616 = vpack.c.bf16 %v1569, %v1569
    %v1617 = vpack.c.bf16 %v1571, %v1571
    %v1618 = vpack.c.bf16 %v1610, %v1610
    %v1619 = vpack.c.bf16 %v1612, %v1612
    %1620 = vmatprep.subr.bf16.mxu0 %v1407
    %1621 = vmatpush1.bf16.msra.mxu0 %v1406
    %1622 = vmatprep.subr.bf16.mxu0 %v1409
    %1623 = vmatpush1.bf16.msra.mxu0 %v1408
    %1624 = vmatprep.subr.bf16.mxu0 %v1411
    %1625 = vmatpush1.bf16.msra.mxu0 %v1410
    %1626 = vmatprep.subr.bf16.mxu0 %v1413
    %1627 = vmatpush1.bf16.msra.mxu0 %v1412
    %1628 = vmatprep.subr.bf16.mxu0 %v1415
    %1629 = vmatpush1.bf16.msra.mxu0 %v1414
    %1630 = vmatprep.subr.bf16.mxu0 %v1417
    %1631 = vmatpush1.bf16.msra.mxu0 %v1416
    %1632 = vmatprep.subr.bf16.mxu0 %v1419
    %1633 = vmatpush1.bf16.msra.mxu0 %v1418
    %1634 = vmatprep.subr.bf16.mxu0 %v1421
    %1635 = vmatpush1.bf16.msra.mxu0 %v1420
    %1636 = vmatprep.subr.bf16.mxu0 %v1423
    %1637 = vmatpush1.bf16.msra.mxu0 %v1422
    %1638 = vmatprep.subr.bf16.mxu0 %v1425
    %1639 = vmatpush1.bf16.msra.mxu0 %v1424
    %1640 = vmatprep.subr.bf16.mxu0 %v1427
    %1641 = vmatpush1.bf16.msra.mxu0 %v1426
    %1642 = vmatprep.subr.bf16.mxu0 %v1429
    %1643 = vmatpush1.bf16.msra.mxu0 %v1428
    %1644 = vmatprep.subr.bf16.mxu0 %v1431
    %1645 = vmatpush1.bf16.msra.mxu0 %v1430
    %1646 = vmatprep.subr.bf16.mxu0 %v1433
    %1647 = vmatpush1.bf16.msra.mxu0 %v1432
    %1648 = vmatprep.subr.bf16.mxu0 %v1435
    %1649 = vmatpush1.bf16.msra.mxu0 %v1434
    %1650 = vmatprep.subr.bf16.mxu0 %v1437
    %1651 = vmatpush1.bf16.msra.mxu0 %v1436
    %1652 = vmatprep.mubr.bf16.mxu0 %v1617
    %1653 = vmatmul.mubr.bf16.gmra.mrb[0].mxu0 %v1616
    %v1654 = vpop.f32.mrb[0].mxu0
    %v1655 = vadd.f32 0.0, %v1654
    %v1656 = vpop.f32.mrb[0].mxu0
    %v1657 = vadd.f32 0.0, %v1656
    %v1658 = vpop.f32.mrb[0].mxu0
    %v1659 = vpop.f32.mrb[0].mxu0
    %1660 = vdwg.mxu0
    %1661 = vmatprep.subr.bf16.mxu0 %v1439
    %1662 = vmatpush1.bf16.msra.mxu0 %v1438
    %1663 = vmatprep.subr.bf16.mxu0 %v1441
    %1664 = vmatpush1.bf16.msra.mxu0 %v1440
    %1665 = vmatprep.subr.bf16.mxu0 %v1443
    %1666 = vmatpush1.bf16.msra.mxu0 %v1442
    %1667 = vmatprep.subr.bf16.mxu0 %v1445
    %1668 = vmatpush1.bf16.msra.mxu0 %v1444
    %1669 = vmatprep.subr.bf16.mxu0 %v1447
    %1670 = vmatpush1.bf16.msra.mxu0 %v1446
    %1671 = vmatprep.subr.bf16.mxu0 %v1449
    %1672 = vmatpush1.bf16.msra.mxu0 %v1448
    %1673 = vmatprep.subr.bf16.mxu0 %v1451
    %1674 = vmatpush1.bf16.msra.mxu0 %v1450
    %1675 = vmatprep.subr.bf16.mxu0 %v1453
    %1676 = vmatpush1.bf16.msra.mxu0 %v1452
    %1677 = vmatprep.subr.bf16.mxu0 %v1455
    %1678 = vmatpush1.bf16.msra.mxu0 %v1454
    %1679 = vmatprep.subr.bf16.mxu0 %v1457
    %1680 = vmatpush1.bf16.msra.mxu0 %v1456
    %1681 = vmatprep.subr.bf16.mxu0 %v1459
    %1682 = vmatpush1.bf16.msra.mxu0 %v1458
    %1683 = vmatprep.subr.bf16.mxu0 %v1461
    %1684 = vmatpush1.bf16.msra.mxu0 %v1460
    %1685 = vmatprep.subr.bf16.mxu0 %v1463
    %1686 = vmatpush1.bf16.msra.mxu0 %v1462
    %1687 = vmatprep.subr.bf16.mxu0 %v1465
    %1688 = vmatpush1.bf16.msra.mxu0 %v1464
    %1689 = vmatprep.subr.bf16.mxu0 %v1467
    %1690 = vmatpush1.bf16.msra.mxu0 %v1466
    %1691 = vmatprep.subr.bf16.mxu0 %v1469
    %1692 = vmatpush1.bf16.msra.mxu0 %v1468
    %1693 = vmatprep.mubr.bf16.mxu0 %v1619
    %1694 = vmatmul.mubr.bf16.gmra.mrb[0].mxu0 %v1618
    %v1695 = vpop.f32.mrb[0].mxu0
    %v1696 = vadd.f32 %v1655, %v1695
    %v1697 = vpop.f32.mrb[0].mxu0
    %v1698 = vadd.f32 %v1657, %v1697
    %v1699 = vpop.f32.mrb[0].mxu0
    %v1700 = vpop.f32.mrb[0].mxu0
    %1701 = vdwg.mxu0
    %v1702 = vadd.f32 %v1144, %v1696
    %v1703 = vadd.f32 %v1146, %v1698
    %v1704 = vld [vmem:[#allocation5 + $0x600] sm:$0xff]
    %v1705 = vld [vmem:[#allocation5 + $0x608] sm:$0xff]
    %v1706 = vld [vmem:[#allocation5 + $0x610] sm:$0xff]
    %v1707 = vld [vmem:[#allocation5 + $0x618] sm:$0xff]
    %v1708 = vld [vmem:[#allocation5 + $0x620] sm:$0xff]
    %v1709 = vld [vmem:[#allocation5 + $0x628] sm:$0xff]
    %v1710 = vld [vmem:[#allocation5 + $0x630] sm:$0xff]
    %v1711 = vld [vmem:[#allocation5 + $0x638] sm:$0xff]
    %v1712 = vld [vmem:[#allocation5 + $0x640] sm:$0xff]
    %v1713 = vld [vmem:[#allocation5 + $0x648] sm:$0xff]
    %v1714 = vld [vmem:[#allocation5 + $0x650] sm:$0xff]
    %v1715 = vld [vmem:[#allocation5 + $0x658] sm:$0xff]
    %v1716 = vld [vmem:[#allocation5 + $0x660] sm:$0xff]
    %v1717 = vld [vmem:[#allocation5 + $0x668] sm:$0xff]
    %v1718 = vld [vmem:[#allocation5 + $0x670] sm:$0xff]
    %v1719 = vld [vmem:[#allocation5 + $0x678] sm:$0xff]
    %v1720 = vld [vmem:[#allocation5 + $0x680] sm:$0xff]
    %v1721 = vld [vmem:[#allocation5 + $0x688] sm:$0xff]
    %v1722 = vld [vmem:[#allocation5 + $0x690] sm:$0xff]
    %v1723 = vld [vmem:[#allocation5 + $0x698] sm:$0xff]
    %v1724 = vld [vmem:[#allocation5 + $0x6a0] sm:$0xff]
    %v1725 = vld [vmem:[#allocation5 + $0x6a8] sm:$0xff]
    %v1726 = vld [vmem:[#allocation5 + $0x6b0] sm:$0xff]
    %v1727 = vld [vmem:[#allocation5 + $0x6b8] sm:$0xff]
    %v1728 = vld [vmem:[#allocation5 + $0x6c0] sm:$0xff]
    %v1729 = vld [vmem:[#allocation5 + $0x6c8] sm:$0xff]
    %v1730 = vld [vmem:[#allocation5 + $0x6d0] sm:$0xff]
    %v1731 = vld [vmem:[#allocation5 + $0x6d8] sm:$0xff]
    %v1732 = vld [vmem:[#allocation5 + $0x6e0] sm:$0xff]
    %v1733 = vld [vmem:[#allocation5 + $0x6e8] sm:$0xff]
    %v1734 = vld [vmem:[#allocation5 + $0x6f0] sm:$0xff]
    %v1735 = vld [vmem:[#allocation5 + $0x6f8] sm:$0xff]
    %v1736 = vld [vmem:[#allocation5 + $0x700] sm:$0xff]
    %v1737 = vld [vmem:[#allocation5 + $0x708] sm:$0xff]
    %v1738 = vld [vmem:[#allocation5 + $0x710] sm:$0xff]
    %v1739 = vld [vmem:[#allocation5 + $0x718] sm:$0xff]
    %v1740 = vld [vmem:[#allocation5 + $0x720] sm:$0xff]
    %v1741 = vld [vmem:[#allocation5 + $0x728] sm:$0xff]
    %v1742 = vld [vmem:[#allocation5 + $0x730] sm:$0xff]
    %v1743 = vld [vmem:[#allocation5 + $0x738] sm:$0xff]
    %v1744 = vld [vmem:[#allocation5 + $0x740] sm:$0xff]
    %v1745 = vld [vmem:[#allocation5 + $0x748] sm:$0xff]
    %v1746 = vld [vmem:[#allocation5 + $0x750] sm:$0xff]
    %v1747 = vld [vmem:[#allocation5 + $0x758] sm:$0xff]
    %v1748 = vld [vmem:[#allocation5 + $0x760] sm:$0xff]
    %v1749 = vld [vmem:[#allocation5 + $0x768] sm:$0xff]
    %v1750 = vld [vmem:[#allocation5 + $0x770] sm:$0xff]
    %v1751 = vld [vmem:[#allocation5 + $0x778] sm:$0xff]
    %v1752 = vld [vmem:[#allocation5 + $0x780] sm:$0xff]
    %v1753 = vld [vmem:[#allocation5 + $0x788] sm:$0xff]
    %v1754 = vld [vmem:[#allocation5 + $0x790] sm:$0xff]
    %v1755 = vld [vmem:[#allocation5 + $0x798] sm:$0xff]
    %v1756 = vld [vmem:[#allocation5 + $0x7a0] sm:$0xff]
    %v1757 = vld [vmem:[#allocation5 + $0x7a8] sm:$0xff]
    %v1758 = vld [vmem:[#allocation5 + $0x7b0] sm:$0xff]
    %v1759 = vld [vmem:[#allocation5 + $0x7b8] sm:$0xff]
    %v1760 = vld [vmem:[#allocation5 + $0x7c0] sm:$0xff]
    %v1761 = vld [vmem:[#allocation5 + $0x7c8] sm:$0xff]
    %v1762 = vld [vmem:[#allocation5 + $0x7d0] sm:$0xff]
    %v1763 = vld [vmem:[#allocation5 + $0x7d8] sm:$0xff]
    %v1764 = vld [vmem:[#allocation5 + $0x7e0] sm:$0xff]
    %v1765 = vld [vmem:[#allocation5 + $0x7e8] sm:$0xff]
    %v1766 = vld [vmem:[#allocation5 + $0x7f0] sm:$0xff]
    %v1767 = vld [vmem:[#allocation5 + $0x7f8] sm:$0xff]
    %v1832 = vunpack.c.l.b16 %v1704
    %v1833 = vunpack.c.h.b16 %v1704
    %v1834 = vunpack.c.l.b16 %v1705
    %v1835 = vunpack.c.h.b16 %v1705
    %v1836 = vunpack.c.l.b16 %v1706
    %v1837 = vunpack.c.h.b16 %v1706
    %v1838 = vunpack.c.l.b16 %v1707
    %v1839 = vunpack.c.h.b16 %v1707
    %v1840 = vunpack.c.l.b16 %v1708
    %v1841 = vunpack.c.h.b16 %v1708
    %v1842 = vunpack.c.l.b16 %v1709
    %v1843 = vunpack.c.h.b16 %v1709
    %v1844 = vunpack.c.l.b16 %v1710
    %v1845 = vunpack.c.h.b16 %v1710
    %v1846 = vunpack.c.l.b16 %v1711
    %v1847 = vunpack.c.h.b16 %v1711
    %v1848 = vunpack.c.l.b16 %v1712
    %v1849 = vunpack.c.h.b16 %v1712
    %v1850 = vunpack.c.l.b16 %v1713
    %v1851 = vunpack.c.h.b16 %v1713
    %v1852 = vunpack.c.l.b16 %v1714
    %v1853 = vunpack.c.h.b16 %v1714
    %v1854 = vunpack.c.l.b16 %v1715
    %v1855 = vunpack.c.h.b16 %v1715
    %v1856 = vunpack.c.l.b16 %v1716
    %v1857 = vunpack.c.h.b16 %v1716
    %v1858 = vunpack.c.l.b16 %v1717
    %v1859 = vunpack.c.h.b16 %v1717
    %v1860 = vunpack.c.l.b16 %v1718
    %v1861 = vunpack.c.h.b16 %v1718
    %v1862 = vunpack.c.l.b16 %v1719
    %v1863 = vunpack.c.h.b16 %v1719
    %v1864 = vunpack.c.l.b16 %v1720
    %v1865 = vunpack.c.h.b16 %v1720
    %v1866 = vunpack.c.l.b16 %v1721
    %v1867 = vunpack.c.h.b16 %v1721
    %v1868 = vunpack.c.l.b16 %v1722
    %v1869 = vunpack.c.h.b16 %v1722
    %v1870 = vunpack.c.l.b16 %v1723
    %v1871 = vunpack.c.h.b16 %v1723
    %v1872 = vunpack.c.l.b16 %v1724
    %v1873 = vunpack.c.h.b16 %v1724
    %v1874 = vunpack.c.l.b16 %v1725
    %v1875 = vunpack.c.h.b16 %v1725
    %v1876 = vunpack.c.l.b16 %v1726
    %v1877 = vunpack.c.h.b16 %v1726
    %v1878 = vunpack.c.l.b16 %v1727
    %v1879 = vunpack.c.h.b16 %v1727
    %v1880 = vunpack.c.l.b16 %v1728
    %v1881 = vunpack.c.h.b16 %v1728
    %v1882 = vunpack.c.l.b16 %v1729
    %v1883 = vunpack.c.h.b16 %v1729
    %v1884 = vunpack.c.l.b16 %v1730
    %v1885 = vunpack.c.h.b16 %v1730
    %v1886 = vunpack.c.l.b16 %v1731
    %v1887 = vunpack.c.h.b16 %v1731
    %v1888 = vunpack.c.l.b16 %v1732
    %v1889 = vunpack.c.h.b16 %v1732
    %v1890 = vunpack.c.l.b16 %v1733
    %v1891 = vunpack.c.h.b16 %v1733
    %v1892 = vunpack.c.l.b16 %v1734
    %v1893 = vunpack.c.h.b16 %v1734
    %v1894 = vunpack.c.l.b16 %v1735
    %v1895 = vunpack.c.h.b16 %v1735
    %v1896 = vunpack.c.l.b16 %v1736
    %v1897 = vunpack.c.h.b16 %v1736
    %v1898 = vunpack.c.l.b16 %v1737
    %v1899 = vunpack.c.h.b16 %v1737
    %v1900 = vunpack.c.l.b16 %v1738
    %v1901 = vunpack.c.h.b16 %v1738
    %v1902 = vunpack.c.l.b16 %v1739
    %v1903 = vunpack.c.h.b16 %v1739
    %v1904 = vunpack.c.l.b16 %v1740
    %v1905 = vunpack.c.h.b16 %v1740
    %v1906 = vunpack.c.l.b16 %v1741
    %v1907 = vunpack.c.h.b16 %v1741
    %v1908 = vunpack.c.l.b16 %v1742
    %v1909 = vunpack.c.h.b16 %v1742
    %v1910 = vunpack.c.l.b16 %v1743
    %v1911 = vunpack.c.h.b16 %v1743
    %v1912 = vunpack.c.l.b16 %v1744
    %v1913 = vunpack.c.h.b16 %v1744
    %v1914 = vunpack.c.l.b16 %v1745
    %v1915 = vunpack.c.h.b16 %v1745
    %v1916 = vunpack.c.l.b16 %v1746
    %v1917 = vunpack.c.h.b16 %v1746
    %v1918 = vunpack.c.l.b16 %v1747
    %v1919 = vunpack.c.h.b16 %v1747
    %v1920 = vunpack.c.l.b16 %v1748
    %v1921 = vunpack.c.h.b16 %v1748
    %v1922 = vunpack.c.l.b16 %v1749
    %v1923 = vunpack.c.h.b16 %v1749
    %v1924 = vunpack.c.l.b16 %v1750
    %v1925 = vunpack.c.h.b16 %v1750
    %v1926 = vunpack.c.l.b16 %v1751
    %v1927 = vunpack.c.h.b16 %v1751
    %v1928 = vunpack.c.l.b16 %v1752
    %v1929 = vunpack.c.h.b16 %v1752
    %v1930 = vunpack.c.l.b16 %v1753
    %v1931 = vunpack.c.h.b16 %v1753
    %v1932 = vunpack.c.l.b16 %v1754
    %v1933 = vunpack.c.h.b16 %v1754
    %v1934 = vunpack.c.l.b16 %v1755
    %v1935 = vunpack.c.h.b16 %v1755
    %v1936 = vunpack.c.l.b16 %v1756
    %v1937 = vunpack.c.h.b16 %v1756
    %v1938 = vunpack.c.l.b16 %v1757
    %v1939 = vunpack.c.h.b16 %v1757
    %v1940 = vunpack.c.l.b16 %v1758
    %v1941 = vunpack.c.h.b16 %v1758
    %v1942 = vunpack.c.l.b16 %v1759
    %v1943 = vunpack.c.h.b16 %v1759
    %v1944 = vunpack.c.l.b16 %v1760
    %v1945 = vunpack.c.h.b16 %v1760
    %v1946 = vunpack.c.l.b16 %v1761
    %v1947 = vunpack.c.h.b16 %v1761
    %v1948 = vunpack.c.l.b16 %v1762
    %v1949 = vunpack.c.h.b16 %v1762
    %v1950 = vunpack.c.l.b16 %v1763
    %v1951 = vunpack.c.h.b16 %v1763
    %v1952 = vunpack.c.l.b16 %v1764
    %v1953 = vunpack.c.h.b16 %v1764
    %v1954 = vunpack.c.l.b16 %v1765
    %v1955 = vunpack.c.h.b16 %v1765
    %v1956 = vunpack.c.l.b16 %v1766
    %v1957 = vunpack.c.h.b16 %v1766
    %v1958 = vunpack.c.l.b16 %v1767
    %v1959 = vunpack.c.h.b16 %v1767
    %v1960 = vpack.c.b16 %v1834, %v1832
    %v1961 = vpack.c.b16 %v1835, %v1833
    %v1962 = vpack.c.b16 %v1838, %v1836
    %v1963 = vpack.c.b16 %v1839, %v1837
    %v1964 = vpack.c.b16 %v1842, %v1840
    %v1965 = vpack.c.b16 %v1843, %v1841
    %v1966 = vpack.c.b16 %v1846, %v1844
    %v1967 = vpack.c.b16 %v1847, %v1845
    %v1968 = vpack.c.b16 %v1850, %v1848
    %v1969 = vpack.c.b16 %v1851, %v1849
    %v1970 = vpack.c.b16 %v1854, %v1852
    %v1971 = vpack.c.b16 %v1855, %v1853
    %v1972 = vpack.c.b16 %v1858, %v1856
    %v1973 = vpack.c.b16 %v1859, %v1857
    %v1974 = vpack.c.b16 %v1862, %v1860
    %v1975 = vpack.c.b16 %v1863, %v1861
    %v1976 = vpack.c.b16 %v1866, %v1864
    %v1977 = vpack.c.b16 %v1867, %v1865
    %v1978 = vpack.c.b16 %v1870, %v1868
    %v1979 = vpack.c.b16 %v1871, %v1869
    %v1980 = vpack.c.b16 %v1874, %v1872
    %v1981 = vpack.c.b16 %v1875, %v1873
    %v1982 = vpack.c.b16 %v1878, %v1876
    %v1983 = vpack.c.b16 %v1879, %v1877
    %v1984 = vpack.c.b16 %v1882, %v1880
    %v1985 = vpack.c.b16 %v1883, %v1881
    %v1986 = vpack.c.b16 %v1886, %v1884
    %v1987 = vpack.c.b16 %v1887, %v1885
    %v1988 = vpack.c.b16 %v1890, %v1888
    %v1989 = vpack.c.b16 %v1891, %v1889
    %v1990 = vpack.c.b16 %v1894, %v1892
    %v1991 = vpack.c.b16 %v1895, %v1893
    %v1992 = vpack.c.b16 %v1898, %v1896
    %v1993 = vpack.c.b16 %v1899, %v1897
    %v1994 = vpack.c.b16 %v1902, %v1900
    %v1995 = vpack.c.b16 %v1903, %v1901
    %v1996 = vpack.c.b16 %v1906, %v1904
    %v1997 = vpack.c.b16 %v1907, %v1905
    %v1998 = vpack.c.b16 %v1910, %v1908
    %v1999 = vpack.c.b16 %v1911, %v1909
    %v2000 = vpack.c.b16 %v1914, %v1912
    %v2001 = vpack.c.b16 %v1915, %v1913
    %v2002 = vpack.c.b16 %v1918, %v1916
    %v2003 = vpack.c.b16 %v1919, %v1917
    %v2004 = vpack.c.b16 %v1922, %v1920
    %v2005 = vpack.c.b16 %v1923, %v1921
    %v2006 = vpack.c.b16 %v1926, %v1924
    %v2007 = vpack.c.b16 %v1927, %v1925
    %v2008 = vpack.c.b16 %v1930, %v1928
    %v2009 = vpack.c.b16 %v1931, %v1929
    %v2010 = vpack.c.b16 %v1934, %v1932
    %v2011 = vpack.c.b16 %v1935, %v1933
    %v2012 = vpack.c.b16 %v1938, %v1936
    %v2013 = vpack.c.b16 %v1939, %v1937
    %v2014 = vpack.c.b16 %v1942, %v1940
    %v2015 = vpack.c.b16 %v1943, %v1941
    %v2016 = vpack.c.b16 %v1946, %v1944
    %v2017 = vpack.c.b16 %v1947, %v1945
    %v2018 = vpack.c.b16 %v1950, %v1948
    %v2019 = vpack.c.b16 %v1951, %v1949
    %v2020 = vpack.c.b16 %v1954, %v1952
    %v2021 = vpack.c.b16 %v1955, %v1953
    %v2022 = vpack.c.b16 %v1958, %v1956
    %v2023 = vpack.c.b16 %v1959, %v1957
    %2088 = vmatprep.subr.bf16.mxu0 %v1961
    %2089 = vmatpush1.bf16.xpose.msra.mxu0 %v1960
    %2090 = vmatprep.subr.bf16.mxu0 %v1963
    %2091 = vmatpush1.bf16.xpose.msra.mxu0 %v1962
    %2092 = vmatprep.subr.bf16.mxu0 %v1965
    %2093 = vmatpush1.bf16.xpose.msra.mxu0 %v1964
    %2094 = vmatprep.subr.bf16.mxu0 %v1967
    %2095 = vmatpush1.bf16.xpose.msra.mxu0 %v1966
    %2096 = vmatprep.subr.bf16.mxu0 %v1969
    %2097 = vmatpush1.bf16.xpose.msra.mxu0 %v1968
    %2098 = vmatprep.subr.bf16.mxu0 %v1971
    %2099 = vmatpush1.bf16.xpose.msra.mxu0 %v1970
    %2100 = vmatprep.subr.bf16.mxu0 %v1973
    %2101 = vmatpush1.bf16.xpose.msra.mxu0 %v1972
    %2102 = vmatprep.subr.bf16.mxu0 %v1975
    %2103 = vmatpush1.bf16.xpose.msra.mxu0 %v1974
    %2104 = vmatprep.subr.bf16.mxu0 %v1977
    %2105 = vmatpush1.bf16.xpose.msra.mxu0 %v1976
    %2106 = vmatprep.subr.bf16.mxu0 %v1979
    %2107 = vmatpush1.bf16.xpose.msra.mxu0 %v1978
    %2108 = vmatprep.subr.bf16.mxu0 %v1981
    %2109 = vmatpush1.bf16.xpose.msra.mxu0 %v1980
    %2110 = vmatprep.subr.bf16.mxu0 %v1983
    %2111 = vmatpush1.bf16.xpose.msra.mxu0 %v1982
    %2112 = vmatprep.subr.bf16.mxu0 %v1985
    %2113 = vmatpush1.bf16.xpose.msra.mxu0 %v1984
    %2114 = vmatprep.subr.bf16.mxu0 %v1987
    %2115 = vmatpush1.bf16.xpose.msra.mxu0 %v1986
    %2116 = vmatprep.subr.bf16.mxu0 %v1989
    %2117 = vmatpush1.bf16.xpose.msra.mxu0 %v1988
    %2118 = vmatprep.subr.bf16.mxu0 %v1991
    %2119 = vmatpush1.bf16.xpose.msra.mxu0 %v1990
    %2120 = vmatprep.mubr.bf16.mxu0 %v107
    %2121 = vmatmul.mubr.bf16.gmra.mrb[0].mxu0 %v106
    %v2122 = vpop.f32.mrb[0].mxu0
    %v2123 = vadd.f32 0.0, %v2122
    %v2124 = vpop.f32.mrb[0].mxu0
    %v2125 = vadd.f32 0.0, %v2124
    %v2126 = vpop.f32.mrb[0].mxu0
    %v2127 = vpop.f32.mrb[0].mxu0
    %2128 = vdwg.mxu0
    %2129 = vmatprep.subr.bf16.mxu0 %v1993
    %2130 = vmatpush1.bf16.xpose.msra.mxu0 %v1992
    %2131 = vmatprep.subr.bf16.mxu0 %v1995
    %2132 = vmatpush1.bf16.xpose.msra.mxu0 %v1994
    %2133 = vmatprep.subr.bf16.mxu0 %v1997
    %2134 = vmatpush1.bf16.xpose.msra.mxu0 %v1996
    %2135 = vmatprep.subr.bf16.mxu0 %v1999
    %2136 = vmatpush1.bf16.xpose.msra.mxu0 %v1998
    %2137 = vmatprep.subr.bf16.mxu0 %v2001
    %2138 = vmatpush1.bf16.xpose.msra.mxu0 %v2000
    %2139 = vmatprep.subr.bf16.mxu0 %v2003
    %2140 = vmatpush1.bf16.xpose.msra.mxu0 %v2002
    %2141 = vmatprep.subr.bf16.mxu0 %v2005
    %2142 = vmatpush1.bf16.xpose.msra.mxu0 %v2004
    %2143 = vmatprep.subr.bf16.mxu0 %v2007
    %2144 = vmatpush1.bf16.xpose.msra.mxu0 %v2006
    %2145 = vmatprep.subr.bf16.mxu0 %v2009
    %2146 = vmatpush1.bf16.xpose.msra.mxu0 %v2008
    %2147 = vmatprep.subr.bf16.mxu0 %v2011
    %2148 = vmatpush1.bf16.xpose.msra.mxu0 %v2010
    %2149 = vmatprep.subr.bf16.mxu0 %v2013
    %2150 = vmatpush1.bf16.xpose.msra.mxu0 %v2012
    %2151 = vmatprep.subr.bf16.mxu0 %v2015
    %2152 = vmatpush1.bf16.xpose.msra.mxu0 %v2014
    %2153 = vmatprep.subr.bf16.mxu0 %v2017
    %2154 = vmatpush1.bf16.xpose.msra.mxu0 %v2016
    %2155 = vmatprep.subr.bf16.mxu0 %v2019
    %2156 = vmatpush1.bf16.xpose.msra.mxu0 %v2018
    %2157 = vmatprep.subr.bf16.mxu0 %v2021
    %2158 = vmatpush1.bf16.xpose.msra.mxu0 %v2020
    %2159 = vmatprep.subr.bf16.mxu0 %v2023
    %2160 = vmatpush1.bf16.xpose.msra.mxu0 %v2022
    %2161 = vmatprep.mubr.bf16.mxu0 %v107
    %2162 = vmatmul.mubr.bf16.gmra.mrb[0].mxu0 %v106
    %v2163 = vpop.f32.mrb[0].mxu0
    %v2164 = vadd.f32 0.0, %v2163
    %v2165 = vpop.f32.mrb[0].mxu0
    %v2166 = vadd.f32 0.0, %v2165
    %v2167 = vpop.f32.mrb[0].mxu0
    %v2168 = vpop.f32.mrb[0].mxu0
    %2169 = vdwg.mxu0
    %v2170 = vpack.c.bf16 %v2123, %v2123
    %v2171 = vpack.c.bf16 %v2125, %v2125
    %v2172 = vpack.c.bf16 %v2164, %v2164
    %v2173 = vpack.c.bf16 %v2166, %v2166
    %2174 = vmatprep.subr.bf16.mxu0 %v1961
    %2175 = vmatpush1.bf16.msra.mxu0 %v1960
    %2176 = vmatprep.subr.bf16.mxu0 %v1963
    %2177 = vmatpush1.bf16.msra.mxu0 %v1962
    %2178 = vmatprep.subr.bf16.mxu0 %v1965
    %2179 = vmatpush1.bf16.msra.mxu0 %v1964
    %2180 = vmatprep.subr.bf16.mxu0 %v1967
    %2181 = vmatpush1.bf16.msra.mxu0 %v1966
    %2182 = vmatprep.subr.bf16.mxu0 %v1969
    %2183 = vmatpush1.bf16.msra.mxu0 %v1968
    %2184 = vmatprep.subr.bf16.mxu0 %v1971
    %2185 = vmatpush1.bf16.msra.mxu0 %v1970
    %2186 = vmatprep.subr.bf16.mxu0 %v1973
    %2187 = vmatpush1.bf16.msra.mxu0 %v1972
    %2188 = vmatprep.subr.bf16.mxu0 %v1975
    %2189 = vmatpush1.bf16.msra.mxu0 %v1974
    %2190 = vmatprep.subr.bf16.mxu0 %v1977
    %2191 = vmatpush1.bf16.msra.mxu0 %v1976
    %2192 = vmatprep.subr.bf16.mxu0 %v1979
    %2193 = vmatpush1.bf16.msra.mxu0 %v1978
    %2194 = vmatprep.subr.bf16.mxu0 %v1981
    %2195 = vmatpush1.bf16.msra.mxu0 %v1980
    %2196 = vmatprep.subr.bf16.mxu0 %v1983
    %2197 = vmatpush1.bf16.msra.mxu0 %v1982
    %2198 = vmatprep.subr.bf16.mxu0 %v1985
    %2199 = vmatpush1.bf16.msra.mxu0 %v1984
    %2200 = vmatprep.subr.bf16.mxu0 %v1987
    %2201 = vmatpush1.bf16.msra.mxu0 %v1986
    %2202 = vmatprep.subr.bf16.mxu0 %v1989
    %2203 = vmatpush1.bf16.msra.mxu0 %v1988
    %2204 = vmatprep.subr.bf16.mxu0 %v1991
    %2205 = vmatpush1.bf16.msra.mxu0 %v1990
    %2206 = vmatprep.mubr.bf16.mxu0 %v2171
    %2207 = vmatmul.mubr.bf16.gmra.mrb[0].mxu0 %v2170
    %v2208 = vpop.f32.mrb[0].mxu0
    %v2209 = vadd.f32 0.0, %v2208
    %v2210 = vpop.f32.mrb[0].mxu0
    %v2211 = vadd.f32 0.0, %v2210
    %v2212 = vpop.f32.mrb[0].mxu0
    %v2213 = vpop.f32.mrb[0].mxu0
    %2214 = vdwg.mxu0
    %2215 = vmatprep.subr.bf16.mxu0 %v1993
    %2216 = vmatpush1.bf16.msra.mxu0 %v1992
    %2217 = vmatprep.subr.bf16.mxu0 %v1995
    %2218 = vmatpush1.bf16.msra.mxu0 %v1994
    %2219 = vmatprep.subr.bf16.mxu0 %v1997
    %2220 = vmatpush1.bf16.msra.mxu0 %v1996
    %2221 = vmatprep.subr.bf16.mxu0 %v1999
    %2222 = vmatpush1.bf16.msra.mxu0 %v1998
    %2223 = vmatprep.subr.bf16.mxu0 %v2001
    %2224 = vmatpush1.bf16.msra.mxu0 %v2000
    %2225 = vmatprep.subr.bf16.mxu0 %v2003
    %2226 = vmatpush1.bf16.msra.mxu0 %v2002
    %2227 = vmatprep.subr.bf16.mxu0 %v2005
    %2228 = vmatpush1.bf16.msra.mxu0 %v2004
    %2229 = vmatprep.subr.bf16.mxu0 %v2007
    %2230 = vmatpush1.bf16.msra.mxu0 %v2006
    %2231 = vmatprep.subr.bf16.mxu0 %v2009
    %2232 = vmatpush1.bf16.msra.mxu0 %v2008
    %2233 = vmatprep.subr.bf16.mxu0 %v2011
    %2234 = vmatpush1.bf16.msra.mxu0 %v2010
    %2235 = vmatprep.subr.bf16.mxu0 %v2013
    %2236 = vmatpush1.bf16.msra.mxu0 %v2012
    %2237 = vmatprep.subr.bf16.mxu0 %v2015
    %2238 = vmatpush1.bf16.msra.mxu0 %v2014
    %2239 = vmatprep.subr.bf16.mxu0 %v2017
    %2240 = vmatpush1.bf16.msra.mxu0 %v2016
    %2241 = vmatprep.subr.bf16.mxu0 %v2019
    %2242 = vmatpush1.bf16.msra.mxu0 %v2018
    %2243 = vmatprep.subr.bf16.mxu0 %v2021
    %2244 = vmatpush1.bf16.msra.mxu0 %v2020
    %2245 = vmatprep.subr.bf16.mxu0 %v2023
    %2246 = vmatpush1.bf16.msra.mxu0 %v2022
    %2247 = vmatprep.mubr.bf16.mxu0 %v2173
    %2248 = vmatmul.mubr.bf16.gmra.mrb[0].mxu0 %v2172
    %v2249 = vpop.f32.mrb[0].mxu0
    %v2250 = vadd.f32 %v2209, %v2249
    %v2251 = vpop.f32.mrb[0].mxu0
    %v2252 = vadd.f32 %v2211, %v2251
    %v2253 = vpop.f32.mrb[0].mxu0
    %v2254 = vpop.f32.mrb[0].mxu0
    %2255 = vdwg.mxu0
    %v2256 = vadd.f32 %v1702, %v2250
    %v2257 = vadd.f32 %v1703, %v2252
    %p2258 = scmp.eq.s32.totalorder 0, 0
    // Predicated region
    $region18: #{tpu_custom_call.1} parent=1 // pred_check
      %p2259 = pneg %p2258
    $region19: #{tpu_custom_call.1} parent=1 // pred_check_branch
      %2261 = sbr.rel (%p2259) target = $region21
    $region20: #{tpu_custom_call.1} parent=1 // pred_region
      %2262 = vst [vmem:[#allocation7] sm:$0xff] %v2256
      %2263 = vst [vmem:[#allocation7 + $0x8] sm:$0xff] %v2257
    $region21: #{tpu_custom_call.1} parent=1 // pred_fallthru
      _
    %p2264 = scmp.ne.s32.totalorder 0, 0
    // Predicated region
    $region22: #{tpu_custom_call.1} parent=1 // pred_check
      %p2265 = pneg %p2264
    $region23: #{tpu_custom_call.1} parent=1 // pred_check_branch
      %2267 = sbr.rel (%p2265) target = $region25
    $region24: #{tpu_custom_call.1} parent=1 // pred_region
      %v2268 = vld [vmem:[#allocation7] sm:$0xff]
      %v2269 = vld [vmem:[#allocation7 + $0x8] sm:$0xff]
      %v2270 = vadd.f32 %v2268, %v2256
      %v2271 = vadd.f32 %v2269, %v2257
      %2272 = vst [vmem:[#allocation7] sm:$0xff] %v2270
      %2273 = vst [vmem:[#allocation7 + $0x8] sm:$0xff] %v2271
    $region25: #{tpu_custom_call.1} parent=1 // pred_fallthru
      _
    // Predicated region
    $region26: #{tpu_custom_call.1} parent=1 // pred_check
      _
    $region27: #{tpu_custom_call.1} parent=1 // pred_check_branch
      %2275 = sbr.rel (0) target = $region29
    $region28: #{tpu_custom_call.1} parent=1 // pred_region
      %s2277 = ssub.s32 256, 256
      %2278 = vsyncadd [#allocation4], %s2277
      %s2280 = sshll.u32 [#allocation7], 4
      %s2281 = int_to_ptr.vmem [resolvable:$true] %s2280
      %2283 = dma.vmem_to_hbm [thread:$0]  %s2281, 256, %s2, [#allocation4]
    $region29: #{tpu_custom_call.1} parent=1 // pred_fallthru
      _
    // Predicated region
    $region30: #{tpu_custom_call.1} parent=1 // pred_check
      _
    $region31: #{tpu_custom_call.1} parent=1 // pred_check_branch
      %2285 = sbr.rel (0) target = $region33
    $region32: #{tpu_custom_call.1} parent=1 // pred_region
      %2286 = dma.done [#allocation4], 256
    $region33: #{tpu_custom_call.1} parent=1 // pred_fallthru
      _
    %2287 = vsyncpa [#allocation3], 1
    %2288 = vsyncpa [#allocation6], 1
    %2289 = vsyncpa [#allocation4], 1

</llo_original>
